<compile_context>
chip_gen: v7x
topology: tpu7x:2x2x1
jax: 0.10.0
libtpu: 0.0.40
codegen_flags: <defaults>
</compile_context>

<pallas_src>
from functools import partial

import jax
import jax.numpy as jnp
from jax.experimental import pallas as pl
from jax.experimental.pallas import tpu as pltpu


def bn_relu_kernel(x_ref, w_ref, b_ref, o_ref, *, eps):
    # x_ref / o_ref: (N, Cb, HW)  -- channels on sublanes, spatial on lanes
    # w_ref / b_ref: (Cb, 1)      -- per-channel affine parameters
    x = x_ref[...]
    if x.dtype != jnp.float32:  # keep math in f32 (v5e has no bf16 VPU path)
        x = x.astype(jnp.float32)

    n_elems = x.shape[0] * x.shape[2]        # full batch*spatial lives in this block
    inv_n = jnp.float32(1.0 / n_elems)

    # One-pass per-channel batch statistics (reductions over batch + lane axes -> XLU).
    sum_x = jnp.sum(x, axis=(0, 2), keepdims=True)          # (1, Cb, 1)
    sum_xx = jnp.sum(x * x, axis=(0, 2), keepdims=True)     # (1, Cb, 1)
    mean = sum_x * inv_n
    var = jnp.maximum(sum_xx * inv_n - mean * mean, 0.0)
    inv_std = jax.lax.rsqrt(var + jnp.float32(eps))          # EUP slot

    # Fold mean into the bias: single fused mul+add+max elementwise pass over x.
    scale = inv_std * w_ref[...].astype(jnp.float32)          # (1, Cb, 1)
    shift = b_ref[...].astype(jnp.float32) - mean * scale     # (1, Cb, 1)
    o_ref[...] = jnp.maximum(x * scale + shift, 0.0).astype(o_ref.dtype)


def _grid_config(C):
    """Block/grid/semantics choice per generation.

    v5e/v6e have one TensorCore: a channel split is just a serial loop, so take the
    whole C as one block.  On v7x (2 TCs) split channels into 256-wide blocks and use
    CORE_PARALLEL so the grid is actually sharded across cores.
    """
    kind = ""
    try:
        kind = (jax.devices()[0].device_kind or "").lower()
    except Exception:
        pass
    if ("v7" in kind and C % 256 == 0 and C // 256 >= 2
            and hasattr(pltpu, "CORE_PARALLEL")):
        return 256, (C // 256,), (pltpu.CORE_PARALLEL,)
    return C, (1,), ("arbitrary",)


def batchnorm_relu(x_nchw, weight, bias, eps=1e-5):
    """y = ReLU(BatchNorm2d(x)) with batch stats. x_nchw: (N,C,H,W); weight/bias: (C,)."""
    N, C, H, W = x_nchw.shape
    HW = H * W

    # Free, contiguous reshape of the NCHW buffer (no transposes around the kernel).
    x3d = x_nchw.reshape(N, C, HW)
    w2d = weight.reshape(C, 1)
    b2d = bias.reshape(C, 1)

    c_blk, grid, semantics = _grid_config(C)

    itemsize = jnp.dtype(x3d.dtype).itemsize
    cost = pl.CostEstimate(
        flops=6 * N * C * HW,            # sumsq + 2 reduction adds + mul + add + max
        transcendentals=C,               # one rsqrt per channel
        bytes_accessed=2 * N * C * HW * itemsize + 2 * C * 4,
    )

    out3d = pl.pallas_call(
        partial(bn_relu_kernel, eps=eps),
        out_shape=jax.ShapeDtypeStruct((N, C, HW), x_nchw.dtype),
        grid=grid,
        in_specs=[
            pl.BlockSpec((N, c_blk, HW), lambda j: (0, j, 0)),
            pl.BlockSpec((c_blk, 1), lambda j: (j, 0)),
            pl.BlockSpec((c_blk, 1), lambda j: (j, 0)),
        ],
        out_specs=pl.BlockSpec((N, c_blk, HW), lambda j: (0, j, 0)),
        compiler_params=pltpu.CompilerParams(dimension_semantics=semantics),
        cost_estimate=cost,
    )(x3d, w2d, b2d)

    return out3d.reshape(N, C, H, W)


if __name__ == "__main__":
    key = jax.random.PRNGKey(0)
    kx, kw, kb = jax.random.split(key, 3)

    # Shapes implied by the module: BatchNorm2d(512) on a (1, 512, 7, 7) input.
    N, C, H, W = 1, 512, 7, 7
    x = jax.random.normal(kx, (N, C, H, W), dtype=jnp.float32)

    # Non-trivial affine params so the w*...+b path is actually validated.
    weight = 1.0 + 0.5 * jax.random.normal(kw, (C,), dtype=jnp.float32)
    bias = 0.1 * jax.random.normal(kb, (C,), dtype=jnp.float32)

    out = batchnorm_relu(x, weight, bias)
    jax.block_until_ready(out)

    # Pure-JAX reference (training-mode BN: biased batch variance) + ReLU.
    mean = jnp.mean(x, axis=(0, 2, 3), keepdims=True)
    var = jnp.mean((x - mean) ** 2, axis=(0, 2, 3), keepdims=True)
    ref = (x - mean) / jnp.sqrt(var + 1e-5)
    ref = ref * weight.reshape(1, C, 1, 1) + bias.reshape(1, C, 1, 1)
    ref = jnp.maximum(ref, 0.0)

    assert out.shape == (N, C, H, W)
    assert out.dtype == x.dtype
    assert jnp.max(jnp.abs(out - ref)) < 1e-4

    print("KERNEL_OK")
</pallas_src>

<mosaic_0001>
module attributes {stable_mosaic.version = 11 : i64} {
  func.func @bn_relu_kernel(%arg0: i32, %arg1: memref<1x512x49xf32, #tpu.memory_space<vmem>>, %arg2: memref<512x1xf32, #tpu.memory_space<vmem>>, %arg3: memref<512x1xf32, #tpu.memory_space<vmem>>, %arg4: memref<1x512x49xf32, #tpu.memory_space<vmem>>) attributes {dimension_semantics = [#tpu.dimension_semantics<arbitrary>], iteration_bounds = array<i64: 1>, scalar_prefetch = 0 : i64, scratch_operands = 0 : i64, tpu.core_type = #tpu.core_type<tc>, window_params = [{transform_indices = @transform_0, window_bounds = array<i64: 1, 512, 49>}, {transform_indices = @transform_1, window_bounds = array<i64: 512, 1>}, {transform_indices = @transform_2, window_bounds = array<i64: 512, 1>}, {transform_indices = @transform_3, window_bounds = array<i64: 1, 512, 49>}]} {
    %c0 = arith.constant 0 : index
    %c0_0 = arith.constant 0 : index
    %c0_1 = arith.constant 0 : index
    %0 = vector.load %arg1[%c0, %c0_0, %c0_1] : memref<1x512x49xf32, #tpu.memory_space<vmem>>, vector<1x512x49xf32>
    %cst = arith.constant dense<0.000000e+00> : vector<512xf32>
    %1 = vector.multi_reduction <add>, %0, %cst [0, 2] : vector<1x512x49xf32> to vector<512xf32>
    %2 = vector.shape_cast %1 : vector<512xf32> to vector<1x512x1xf32>
    %3 = arith.mulf %0, %0 : vector<1x512x49xf32>
    %cst_2 = arith.constant dense<0.000000e+00> : vector<512xf32>
    %4 = vector.multi_reduction <add>, %3, %cst_2 [0, 2] : vector<1x512x49xf32> to vector<512xf32>
    %5 = vector.shape_cast %4 : vector<512xf32> to vector<1x512x1xf32>
    %cst_3 = arith.constant 0.0204081628 : f32
    %6 = vector.broadcast %cst_3 : f32 to vector<1x512x1xf32>
    %7 = arith.mulf %2, %6 : vector<1x512x1xf32>
    %cst_4 = arith.constant 0.0204081628 : f32
    %8 = vector.broadcast %cst_4 : f32 to vector<1x512x1xf32>
    %9 = arith.mulf %5, %8 : vector<1x512x1xf32>
    %10 = arith.mulf %7, %7 : vector<1x512x1xf32>
    %11 = arith.subf %9, %10 : vector<1x512x1xf32>
    %cst_5 = arith.constant 0.000000e+00 : f32
    %12 = vector.broadcast %cst_5 : f32 to vector<1x512x1xf32>
    %13 = arith.maximumf %11, %12 : vector<1x512x1xf32>
    %cst_6 = arith.constant 9.99999974E-6 : f32
    %14 = vector.broadcast %cst_6 : f32 to vector<1x512x1xf32>
    %15 = arith.addf %13, %14 : vector<1x512x1xf32>
    %16 = math.rsqrt %15 : vector<1x512x1xf32>
    %c0_7 = arith.constant 0 : index
    %c0_8 = arith.constant 0 : index
    %17 = vector.load %arg2[%c0_7, %c0_8] : memref<512x1xf32, #tpu.memory_space<vmem>>, vector<512x1xf32>
    %18 = vector.shape_cast %17 : vector<512x1xf32> to vector<1x512x1xf32>
    %19 = arith.mulf %16, %18 : vector<1x512x1xf32>
    %c0_9 = arith.constant 0 : index
    %c0_10 = arith.constant 0 : index
    %20 = vector.load %arg3[%c0_9, %c0_10] : memref<512x1xf32, #tpu.memory_space<vmem>>, vector<512x1xf32>
    %21 = arith.mulf %7, %19 : vector<1x512x1xf32>
    %22 = vector.shape_cast %20 : vector<512x1xf32> to vector<1x512x1xf32>
    %23 = arith.subf %22, %21 : vector<1x512x1xf32>
    %24 = vector.broadcast %19 : vector<1x512x1xf32> to vector<1x512x49xf32>
    %25 = arith.mulf %0, %24 : vector<1x512x49xf32>
    %26 = vector.broadcast %23 : vector<1x512x1xf32> to vector<1x512x49xf32>
    %27 = arith.addf %25, %26 : vector<1x512x49xf32>
    %cst_11 = arith.constant 0.000000e+00 : f32
    %28 = vector.broadcast %cst_11 : f32 to vector<1x512x49xf32>
    %29 = arith.maximumf %27, %28 : vector<1x512x49xf32>
    %c0_12 = arith.constant 0 : index
    %c0_13 = arith.constant 0 : index
    %c0_14 = arith.constant 0 : index
    %30 = vector.load %arg4[%c0_12, %c0_13, %c0_14] : memref<1x512x49xf32, #tpu.memory_space<vmem>>, vector<1x512x49xf32>
    tpu.vector_store %arg4[%c0_12, %c0_13, %c0_14], %29 {strides = array<i32>} : memref<1x512x49xf32, #tpu.memory_space<vmem>>, vector<1x512x49xf32>,
    return
  }
  func.func @transform_0(%arg0: i32) -> (i32, i32, i32) {
    %c0_i32 = arith.constant 0 : i32
    %c0_i32_0 = arith.constant 0 : i32
    %c0_i32_1 = arith.constant 0 : i32
    return %c0_i32, %arg0, %c0_i32_0 : i32, i32, i32
  }
  func.func @transform_1(%arg0: i32) -> (i32, i32) {
    %c0_i32 = arith.constant 0 : i32
    %c0_i32_0 = arith.constant 0 : i32
    return %arg0, %c0_i32 : i32, i32
  }
  func.func @transform_2(%arg0: i32) -> (i32, i32) {
    %c0_i32 = arith.constant 0 : i32
    %c0_i32_0 = arith.constant 0 : i32
    return %arg0, %c0_i32 : i32, i32
  }
  func.func @transform_3(%arg0: i32) -> (i32, i32, i32) {
    %c0_i32 = arith.constant 0 : i32
    %c0_i32_0 = arith.constant 0 : i32
    %c0_i32_1 = arith.constant 0 : i32
    return %c0_i32, %arg0, %c0_i32_0 : i32, i32, i32
  }
}

</mosaic_0001>

<llo_original>
// kernel: tpu_custom_call.1
$region0: #{tpu_custom_call.1}
  #allocation0 [shape = 'u32[]', space=smem, size = 0x4, offset = 0x4, fixed_abs, tag = 'smem constant byte address 0x4 - core index']
  #allocation1 [shape = 'u32[144,128]{1,0:T(1,128)}', space=vmem, size = 0x12000, scoped, tag = 'internal scratch']
  %s0 = inlined_call_operand.vmem [shape: f32[1,512,49], index: 0, kind: input, shape index: {}]
  %s1 = inlined_call_operand.vmem [shape: f32[512,1], index: 1, kind: input, shape index: {}]
  %s2 = inlined_call_operand.vmem [shape: f32[512,1], index: 2, kind: input, shape index: {}]
  %s3 = inlined_call_operand.vmem [shape: f32[1,512,49], index: 3, kind: output, shape index: {}]
  %s4 = sld [smem:[#allocation0]]
  $region22: #{tpu_custom_call.1} parent=0
    _
  %s6 = ssub.s32 1, %s4
  %s7 = scalar_select 0, %s6, %s4
  // Predicated region
  $region2: #{tpu_custom_call.1} parent=0 // pred_check
    _
  $region3: #{tpu_custom_call.1} parent=0 // pred_check_branch
    %9 = sbr.rel (0) target = $region5
  $region4: #{tpu_custom_call.1} parent=0 // pred_region
    _
  $region5: #{tpu_custom_call.1} parent=0 // pred_fallthru
    _
  // Predicated region
  $region6: #{tpu_custom_call.1} parent=0 // pred_check
    _
  $region7: #{tpu_custom_call.1} parent=0 // pred_check_branch
    %11 = sbr.rel (0) target = $region9
  $region8: #{tpu_custom_call.1} parent=0 // pred_region
    _
  $region9: #{tpu_custom_call.1} parent=0 // pred_fallthru
    _
  // Predicated region
  $region10: #{tpu_custom_call.1} parent=0 // pred_check
    _
  $region11: #{tpu_custom_call.1} parent=0 // pred_check_branch
    %13 = sbr.rel (0) target = $region13
  $region12: #{tpu_custom_call.1} parent=0 // pred_region
    _
  $region13: #{tpu_custom_call.1} parent=0 // pred_fallthru
    _
  %v14 = vld [vmem:[%s0] sm:$0xff]
  %v15 = vld [vmem:[%s0 + $0x8] sm:$0xff]
  %v16 = vld [vmem:[%s0 + $0x10] sm:$0xff]
  %v17 = vld [vmem:[%s0 + $0x18] sm:$0xff]
  %v18 = vld [vmem:[%s0 + $0x20] sm:$0xff]
  %v19 = vld [vmem:[%s0 + $0x28] sm:$0xff]
  %v20 = vld [vmem:[%s0 + $0x30] sm:$0xff]
  %v21 = vld [vmem:[%s0 + $0x38] sm:$0xff]
  %v22 = vld [vmem:[%s0 + $0x40] sm:$0xff]
  %v23 = vld [vmem:[%s0 + $0x48] sm:$0xff]
  %v24 = vld [vmem:[%s0 + $0x50] sm:$0xff]
  %v25 = vld [vmem:[%s0 + $0x58] sm:$0xff]
  %v26 = vld [vmem:[%s0 + $0x60] sm:$0xff]
  %v27 = vld [vmem:[%s0 + $0x68] sm:$0xff]
  %v28 = vld [vmem:[%s0 + $0x70] sm:$0xff]
  %v29 = vld [vmem:[%s0 + $0x78] sm:$0xff]
  %v30 = vld [vmem:[%s0 + $0x80] sm:$0xff]
  %v31 = vld [vmem:[%s0 + $0x88] sm:$0xff]
  %v32 = vld [vmem:[%s0 + $0x90] sm:$0xff]
  %v33 = vld [vmem:[%s0 + $0x98] sm:$0xff]
  %v34 = vld [vmem:[%s0 + $0xa0] sm:$0xff]
  %v35 = vld [vmem:[%s0 + $0xa8] sm:$0xff]
  %v36 = vld [vmem:[%s0 + $0xb0] sm:$0xff]
  %v37 = vld [vmem:[%s0 + $0xb8] sm:$0xff]
  %v38 = vld [vmem:[%s0 + $0xc0] sm:$0xff]
  %v39 = vld [vmem:[%s0 + $0xc8] sm:$0xff]
  %v40 = vld [vmem:[%s0 + $0xd0] sm:$0xff]
  %v41 = vld [vmem:[%s0 + $0xd8] sm:$0xff]
  %v42 = vld [vmem:[%s0 + $0xe0] sm:$0xff]
  %v43 = vld [vmem:[%s0 + $0xe8] sm:$0xff]
  %v44 = vld [vmem:[%s0 + $0xf0] sm:$0xff]
  %v45 = vld [vmem:[%s0 + $0xf8] sm:$0xff]
  %v46 = vld [vmem:[%s0 + $0x100] sm:$0xff]
  %v47 = vld [vmem:[%s0 + $0x108] sm:$0xff]
  %v48 = vld [vmem:[%s0 + $0x110] sm:$0xff]
  %v49 = vld [vmem:[%s0 + $0x118] sm:$0xff]
  %v50 = vld [vmem:[%s0 + $0x120] sm:$0xff]
  %v51 = vld [vmem:[%s0 + $0x128] sm:$0xff]
  %v52 = vld [vmem:[%s0 + $0x130] sm:$0xff]
  %v53 = vld [vmem:[%s0 + $0x138] sm:$0xff]
  %v54 = vld [vmem:[%s0 + $0x140] sm:$0xff]
  %v55 = vld [vmem:[%s0 + $0x148] sm:$0xff]
  %v56 = vld [vmem:[%s0 + $0x150] sm:$0xff]
  %v57 = vld [vmem:[%s0 + $0x158] sm:$0xff]
  %v58 = vld [vmem:[%s0 + $0x160] sm:$0xff]
  %v59 = vld [vmem:[%s0 + $0x168] sm:$0xff]
  %v60 = vld [vmem:[%s0 + $0x170] sm:$0xff]
  %v61 = vld [vmem:[%s0 + $0x178] sm:$0xff]
  %v62 = vld [vmem:[%s0 + $0x180] sm:$0xff]
  %v63 = vld [vmem:[%s0 + $0x188] sm:$0xff]
  %v64 = vld [vmem:[%s0 + $0x190] sm:$0xff]
  %v65 = vld [vmem:[%s0 + $0x198] sm:$0xff]
  %v66 = vld [vmem:[%s0 + $0x1a0] sm:$0xff]
  %v67 = vld [vmem:[%s0 + $0x1a8] sm:$0xff]
  %v68 = vld [vmem:[%s0 + $0x1b0] sm:$0xff]
  %v69 = vld [vmem:[%s0 + $0x1b8] sm:$0xff]
  %v70 = vld [vmem:[%s0 + $0x1c0] sm:$0xff]
  %v71 = vld [vmem:[%s0 + $0x1c8] sm:$0xff]
  %v72 = vld [vmem:[%s0 + $0x1d0] sm:$0xff]
  %v73 = vld [vmem:[%s0 + $0x1d8] sm:$0xff]
  %v74 = vld [vmem:[%s0 + $0x1e0] sm:$0xff]
  %v75 = vld [vmem:[%s0 + $0x1e8] sm:$0xff]
  %v76 = vld [vmem:[%s0 + $0x1f0] sm:$0xff]
  %v77 = vld [vmem:[%s0 + $0x1f8] sm:$0xff]
  %vm78 = vcmask 400384
  %v79 = vsel %vm78, %v14, 0.0
  %80 = vadd.xlane.f32.xlu0 %v79
  %v81 = vpop.xlane.xlu0 %80
  %v82 = vsel %vm78, %v15, 0.0
  %83 = vadd.xlane.f32.xlu0 %v82
  %v84 = vpop.xlane.xlu0 %83
  %v85 = vsel %vm78, %v16, 0.0
  %86 = vadd.xlane.f32.xlu0 %v85
  %v87 = vpop.xlane.xlu0 %86
  %v88 = vsel %vm78, %v17, 0.0
  %89 = vadd.xlane.f32.xlu0 %v88
  %v90 = vpop.xlane.xlu0 %89
  %v91 = vsel %vm78, %v18, 0.0
  %92 = vadd.xlane.f32.xlu0 %v91
  %v93 = vpop.xlane.xlu0 %92
  %v94 = vsel %vm78, %v19, 0.0
  %95 = vadd.xlane.f32.xlu0 %v94
  %v96 = vpop.xlane.xlu0 %95
  %v97 = vsel %vm78, %v20, 0.0
  %98 = vadd.xlane.f32.xlu0 %v97
  %v99 = vpop.xlane.xlu0 %98
  %v100 = vsel %vm78, %v21, 0.0
  %101 = vadd.xlane.f32.xlu0 %v100
  %v102 = vpop.xlane.xlu0 %101
  %v103 = vsel %vm78, %v22, 0.0
  %104 = vadd.xlane.f32.xlu0 %v103
  %v105 = vpop.xlane.xlu0 %104
  %v106 = vsel %vm78, %v23, 0.0
  %107 = vadd.xlane.f32.xlu0 %v106
  %v108 = vpop.xlane.xlu0 %107
  %v109 = vsel %vm78, %v24, 0.0
  %110 = vadd.xlane.f32.xlu0 %v109
  %v111 = vpop.xlane.xlu0 %110
  %v112 = vsel %vm78, %v25, 0.0
  %113 = vadd.xlane.f32.xlu0 %v112
  %v114 = vpop.xlane.xlu0 %113
  %v115 = vsel %vm78, %v26, 0.0
  %116 = vadd.xlane.f32.xlu0 %v115
  %v117 = vpop.xlane.xlu0 %116
  %v118 = vsel %vm78, %v27, 0.0
  %119 = vadd.xlane.f32.xlu0 %v118
  %v120 = vpop.xlane.xlu0 %119
  %v121 = vsel %vm78, %v28, 0.0
  %122 = vadd.xlane.f32.xlu0 %v121
  %v123 = vpop.xlane.xlu0 %122
  %v124 = vsel %vm78, %v29, 0.0
  %125 = vadd.xlane.f32.xlu0 %v124
  %v126 = vpop.xlane.xlu0 %125
  %v127 = vsel %vm78, %v30, 0.0
  %128 = vadd.xlane.f32.xlu0 %v127
  %v129 = vpop.xlane.xlu0 %128
  %v130 = vsel %vm78, %v31, 0.0
  %131 = vadd.xlane.f32.xlu0 %v130
  %v132 = vpop.xlane.xlu0 %131
  %v133 = vsel %vm78, %v32, 0.0
  %134 = vadd.xlane.f32.xlu0 %v133
  %v135 = vpop.xlane.xlu0 %134
  %v136 = vsel %vm78, %v33, 0.0
  %137 = vadd.xlane.f32.xlu0 %v136
  %v138 = vpop.xlane.xlu0 %137
  %v139 = vsel %vm78, %v34, 0.0
  %140 = vadd.xlane.f32.xlu0 %v139
  %v141 = vpop.xlane.xlu0 %140
  %v142 = vsel %vm78, %v35, 0.0
  %143 = vadd.xlane.f32.xlu0 %v142
  %v144 = vpop.xlane.xlu0 %143
  %v145 = vsel %vm78, %v36, 0.0
  %146 = vadd.xlane.f32.xlu0 %v145
  %v147 = vpop.xlane.xlu0 %146
  %v148 = vsel %vm78, %v37, 0.0
  %149 = vadd.xlane.f32.xlu0 %v148
  %v150 = vpop.xlane.xlu0 %149
  %v151 = vsel %vm78, %v38, 0.0
  %152 = vadd.xlane.f32.xlu0 %v151
  %v153 = vpop.xlane.xlu0 %152
  %v154 = vsel %vm78, %v39, 0.0
  %155 = vadd.xlane.f32.xlu0 %v154
  %v156 = vpop.xlane.xlu0 %155
  %v157 = vsel %vm78, %v40, 0.0
  %158 = vadd.xlane.f32.xlu0 %v157
  %v159 = vpop.xlane.xlu0 %158
  %v160 = vsel %vm78, %v41, 0.0
  %161 = vadd.xlane.f32.xlu0 %v160
  %v162 = vpop.xlane.xlu0 %161
  %v163 = vsel %vm78, %v42, 0.0
  %164 = vadd.xlane.f32.xlu0 %v163
  %v165 = vpop.xlane.xlu0 %164
  %v166 = vsel %vm78, %v43, 0.0
  %167 = vadd.xlane.f32.xlu0 %v166
  %v168 = vpop.xlane.xlu0 %167
  %v169 = vsel %vm78, %v44, 0.0
  %170 = vadd.xlane.f32.xlu0 %v169
  %v171 = vpop.xlane.xlu0 %170
  %v172 = vsel %vm78, %v45, 0.0
  %173 = vadd.xlane.f32.xlu0 %v172
  %v174 = vpop.xlane.xlu0 %173
  %v175 = vsel %vm78, %v46, 0.0
  %176 = vadd.xlane.f32.xlu0 %v175
  %v177 = vpop.xlane.xlu0 %176
  %v178 = vsel %vm78, %v47, 0.0
  %179 = vadd.xlane.f32.xlu0 %v178
  %v180 = vpop.xlane.xlu0 %179
  %v181 = vsel %vm78, %v48, 0.0
  %182 = vadd.xlane.f32.xlu0 %v181
  %v183 = vpop.xlane.xlu0 %182
  %v184 = vsel %vm78, %v49, 0.0
  %185 = vadd.xlane.f32.xlu0 %v184
  %v186 = vpop.xlane.xlu0 %185
  %v187 = vsel %vm78, %v50, 0.0
  %188 = vadd.xlane.f32.xlu0 %v187
  %v189 = vpop.xlane.xlu0 %188
  %v190 = vsel %vm78, %v51, 0.0
  %191 = vadd.xlane.f32.xlu0 %v190
  %v192 = vpop.xlane.xlu0 %191
  %v193 = vsel %vm78, %v52, 0.0
  %194 = vadd.xlane.f32.xlu0 %v193
  %v195 = vpop.xlane.xlu0 %194
  %v196 = vsel %vm78, %v53, 0.0
  %197 = vadd.xlane.f32.xlu0 %v196
  %v198 = vpop.xlane.xlu0 %197
  %v199 = vsel %vm78, %v54, 0.0
  %200 = vadd.xlane.f32.xlu0 %v199
  %v201 = vpop.xlane.xlu0 %200
  %v202 = vsel %vm78, %v55, 0.0
  %203 = vadd.xlane.f32.xlu0 %v202
  %v204 = vpop.xlane.xlu0 %203
  %v205 = vsel %vm78, %v56, 0.0
  %206 = vadd.xlane.f32.xlu0 %v205
  %v207 = vpop.xlane.xlu0 %206
  %v208 = vsel %vm78, %v57, 0.0
  %209 = vadd.xlane.f32.xlu0 %v208
  %v210 = vpop.xlane.xlu0 %209
  %v211 = vsel %vm78, %v58, 0.0
  %212 = vadd.xlane.f32.xlu0 %v211
  %v213 = vpop.xlane.xlu0 %212
  %v214 = vsel %vm78, %v59, 0.0
  %215 = vadd.xlane.f32.xlu0 %v214
  %v216 = vpop.xlane.xlu0 %215
  %v217 = vsel %vm78, %v60, 0.0
  %218 = vadd.xlane.f32.xlu0 %v217
  %v219 = vpop.xlane.xlu0 %218
  %v220 = vsel %vm78, %v61, 0.0
  %221 = vadd.xlane.f32.xlu0 %v220
  %v222 = vpop.xlane.xlu0 %221
  %v223 = vsel %vm78, %v62, 0.0
  %224 = vadd.xlane.f32.xlu0 %v223
  %v225 = vpop.xlane.xlu0 %224
  %v226 = vsel %vm78, %v63, 0.0
  %227 = vadd.xlane.f32.xlu0 %v226
  %v228 = vpop.xlane.xlu0 %227
  %v229 = vsel %vm78, %v64, 0.0
  %230 = vadd.xlane.f32.xlu0 %v229
  %v231 = vpop.xlane.xlu0 %230
  %v232 = vsel %vm78, %v65, 0.0
  %233 = vadd.xlane.f32.xlu0 %v232
  %v234 = vpop.xlane.xlu0 %233
  %v235 = vsel %vm78, %v66, 0.0
  %236 = vadd.xlane.f32.xlu0 %v235
  %v237 = vpop.xlane.xlu0 %236
  %v238 = vsel %vm78, %v67, 0.0
  %239 = vadd.xlane.f32.xlu0 %v238
  %v240 = vpop.xlane.xlu0 %239
  %v241 = vsel %vm78, %v68, 0.0
  %242 = vadd.xlane.f32.xlu0 %v241
  %v243 = vpop.xlane.xlu0 %242
  %v244 = vsel %vm78, %v69, 0.0
  %245 = vadd.xlane.f32.xlu0 %v244
  %v246 = vpop.xlane.xlu0 %245
  %v247 = vsel %vm78, %v70, 0.0
  %248 = vadd.xlane.f32.xlu0 %v247
  %v249 = vpop.xlane.xlu0 %248
  %v250 = vsel %vm78, %v71, 0.0
  %251 = vadd.xlane.f32.xlu0 %v250
  %v252 = vpop.xlane.xlu0 %251
  %v253 = vsel %vm78, %v72, 0.0
  %254 = vadd.xlane.f32.xlu0 %v253
  %v255 = vpop.xlane.xlu0 %254
  %v256 = vsel %vm78, %v73, 0.0
  %257 = vadd.xlane.f32.xlu0 %v256
  %v258 = vpop.xlane.xlu0 %257
  %v259 = vsel %vm78, %v74, 0.0
  %260 = vadd.xlane.f32.xlu0 %v259
  %v261 = vpop.xlane.xlu0 %260
  %v262 = vsel %vm78, %v75, 0.0
  %263 = vadd.xlane.f32.xlu0 %v262
  %v264 = vpop.xlane.xlu0 %263
  %v265 = vsel %vm78, %v76, 0.0
  %266 = vadd.xlane.f32.xlu0 %v265
  %v267 = vpop.xlane.xlu0 %266
  %v268 = vsel %vm78, %v77, 0.0
  %269 = vadd.xlane.f32.xlu0 %v268
  %v270 = vpop.xlane.xlu0 %269
  %v271 = vmul.f32 %v14, %v14
  %v272 = vmul.f32 %v15, %v15
  %v273 = vmul.f32 %v16, %v16
  %v274 = vmul.f32 %v17, %v17
  %v275 = vmul.f32 %v18, %v18
  %v276 = vmul.f32 %v19, %v19
  %v277 = vmul.f32 %v20, %v20
  %v278 = vmul.f32 %v21, %v21
  %v279 = vmul.f32 %v22, %v22
  %v280 = vmul.f32 %v23, %v23
  %v281 = vmul.f32 %v24, %v24
  %v282 = vmul.f32 %v25, %v25
  %v283 = vmul.f32 %v26, %v26
  %v284 = vmul.f32 %v27, %v27
  %v285 = vmul.f32 %v28, %v28
  %v286 = vmul.f32 %v29, %v29
  %v287 = vmul.f32 %v30, %v30
  %v288 = vmul.f32 %v31, %v31
  %v289 = vmul.f32 %v32, %v32
  %v290 = vmul.f32 %v33, %v33
  %v291 = vmul.f32 %v34, %v34
  %v292 = vmul.f32 %v35, %v35
  %v293 = vmul.f32 %v36, %v36
  %v294 = vmul.f32 %v37, %v37
  %v295 = vmul.f32 %v38, %v38
  %v296 = vmul.f32 %v39, %v39
  %v297 = vmul.f32 %v40, %v40
  %v298 = vmul.f32 %v41, %v41
  %v299 = vmul.f32 %v42, %v42
  %v300 = vmul.f32 %v43, %v43
  %v301 = vmul.f32 %v44, %v44
  %v302 = vmul.f32 %v45, %v45
  %v303 = vmul.f32 %v46, %v46
  %v304 = vmul.f32 %v47, %v47
  %v305 = vmul.f32 %v48, %v48
  %v306 = vmul.f32 %v49, %v49
  %v307 = vmul.f32 %v50, %v50
  %v308 = vmul.f32 %v51, %v51
  %v309 = vmul.f32 %v52, %v52
  %v310 = vmul.f32 %v53, %v53
  %v311 = vmul.f32 %v54, %v54
  %v312 = vmul.f32 %v55, %v55
  %v313 = vmul.f32 %v56, %v56
  %v314 = vmul.f32 %v57, %v57
  %v315 = vmul.f32 %v58, %v58
  %v316 = vmul.f32 %v59, %v59
  %v317 = vmul.f32 %v60, %v60
  %v318 = vmul.f32 %v61, %v61
  %v319 = vmul.f32 %v62, %v62
  %v320 = vmul.f32 %v63, %v63
  %v321 = vmul.f32 %v64, %v64
  %v322 = vmul.f32 %v65, %v65
  %v323 = vmul.f32 %v66, %v66
  %v324 = vmul.f32 %v67, %v67
  %v325 = vmul.f32 %v68, %v68
  %v326 = vmul.f32 %v69, %v69
  %v327 = vmul.f32 %v70, %v70
  %v328 = vmul.f32 %v71, %v71
  %v329 = vmul.f32 %v72, %v72
  %v330 = vmul.f32 %v73, %v73
  %v331 = vmul.f32 %v74, %v74
  %v332 = vmul.f32 %v75, %v75
  %v333 = vmul.f32 %v76, %v76
  %v334 = vmul.f32 %v77, %v77
  %v335 = vsel %vm78, %v271, 0.0
  %336 = vadd.xlane.f32.xlu0 %v335
  %v337 = vpop.xlane.xlu0 %336
  %v338 = vsel %vm78, %v272, 0.0
  %339 = vadd.xlane.f32.xlu0 %v338
  %v340 = vpop.xlane.xlu0 %339
  %v341 = vsel %vm78, %v273, 0.0
  %342 = vadd.xlane.f32.xlu0 %v341
  %v343 = vpop.xlane.xlu0 %342
  %v344 = vsel %vm78, %v274, 0.0
  %345 = vadd.xlane.f32.xlu0 %v344
  %v346 = vpop.xlane.xlu0 %345
  %v347 = vsel %vm78, %v275, 0.0
  %348 = vadd.xlane.f32.xlu0 %v347
  %v349 = vpop.xlane.xlu0 %348
  %v350 = vsel %vm78, %v276, 0.0
  %351 = vadd.xlane.f32.xlu0 %v350
  %v352 = vpop.xlane.xlu0 %351
  %v353 = vsel %vm78, %v277, 0.0
  %354 = vadd.xlane.f32.xlu0 %v353
  %v355 = vpop.xlane.xlu0 %354
  %v356 = vsel %vm78, %v278, 0.0
  %357 = vadd.xlane.f32.xlu0 %v356
  %v358 = vpop.xlane.xlu0 %357
  %v359 = vsel %vm78, %v279, 0.0
  %360 = vadd.xlane.f32.xlu0 %v359
  %v361 = vpop.xlane.xlu0 %360
  %v362 = vsel %vm78, %v280, 0.0
  %363 = vadd.xlane.f32.xlu0 %v362
  %v364 = vpop.xlane.xlu0 %363
  %v365 = vsel %vm78, %v281, 0.0
  %366 = vadd.xlane.f32.xlu0 %v365
  %v367 = vpop.xlane.xlu0 %366
  %v368 = vsel %vm78, %v282, 0.0
  %369 = vadd.xlane.f32.xlu0 %v368
  %v370 = vpop.xlane.xlu0 %369
  %v371 = vsel %vm78, %v283, 0.0
  %372 = vadd.xlane.f32.xlu0 %v371
  %v373 = vpop.xlane.xlu0 %372
  %v374 = vsel %vm78, %v284, 0.0
  %375 = vadd.xlane.f32.xlu0 %v374
  %v376 = vpop.xlane.xlu0 %375
  %v377 = vsel %vm78, %v285, 0.0
  %378 = vadd.xlane.f32.xlu0 %v377
  %v379 = vpop.xlane.xlu0 %378
  %v380 = vsel %vm78, %v286, 0.0
  %381 = vadd.xlane.f32.xlu0 %v380
  %v382 = vpop.xlane.xlu0 %381
  %v383 = vsel %vm78, %v287, 0.0
  %384 = vadd.xlane.f32.xlu0 %v383
  %v385 = vpop.xlane.xlu0 %384
  %v386 = vsel %vm78, %v288, 0.0
  %387 = vadd.xlane.f32.xlu0 %v386
  %v388 = vpop.xlane.xlu0 %387
  %v389 = vsel %vm78, %v289, 0.0
  %390 = vadd.xlane.f32.xlu0 %v389
  %v391 = vpop.xlane.xlu0 %390
  %v392 = vsel %vm78, %v290, 0.0
  %393 = vadd.xlane.f32.xlu0 %v392
  %v394 = vpop.xlane.xlu0 %393
  %v395 = vsel %vm78, %v291, 0.0
  %396 = vadd.xlane.f32.xlu0 %v395
  %v397 = vpop.xlane.xlu0 %396
  %v398 = vsel %vm78, %v292, 0.0
  %399 = vadd.xlane.f32.xlu0 %v398
  %v400 = vpop.xlane.xlu0 %399
  %v401 = vsel %vm78, %v293, 0.0
  %402 = vadd.xlane.f32.xlu0 %v401
  %v403 = vpop.xlane.xlu0 %402
  %v404 = vsel %vm78, %v294, 0.0
  %405 = vadd.xlane.f32.xlu0 %v404
  %v406 = vpop.xlane.xlu0 %405
  %v407 = vsel %vm78, %v295, 0.0
  %408 = vadd.xlane.f32.xlu0 %v407
  %v409 = vpop.xlane.xlu0 %408
  %v410 = vsel %vm78, %v296, 0.0
  %411 = vadd.xlane.f32.xlu0 %v410
  %v412 = vpop.xlane.xlu0 %411
  %v413 = vsel %vm78, %v297, 0.0
  %414 = vadd.xlane.f32.xlu0 %v413
  %v415 = vpop.xlane.xlu0 %414
  %v416 = vsel %vm78, %v298, 0.0
  %417 = vadd.xlane.f32.xlu0 %v416
  %v418 = vpop.xlane.xlu0 %417
  %v419 = vsel %vm78, %v299, 0.0
  %420 = vadd.xlane.f32.xlu0 %v419
  %v421 = vpop.xlane.xlu0 %420
  %v422 = vsel %vm78, %v300, 0.0
  %423 = vadd.xlane.f32.xlu0 %v422
  %v424 = vpop.xlane.xlu0 %423
  %v425 = vsel %vm78, %v301, 0.0
  %426 = vadd.xlane.f32.xlu0 %v425
  %v427 = vpop.xlane.xlu0 %426
  %v428 = vsel %vm78, %v302, 0.0
  %429 = vadd.xlane.f32.xlu0 %v428
  %v430 = vpop.xlane.xlu0 %429
  %v431 = vsel %vm78, %v303, 0.0
  %432 = vadd.xlane.f32.xlu0 %v431
  %v433 = vpop.xlane.xlu0 %432
  %v434 = vsel %vm78, %v304, 0.0
  %435 = vadd.xlane.f32.xlu0 %v434
  %v436 = vpop.xlane.xlu0 %435
  %v437 = vsel %vm78, %v305, 0.0
  %438 = vadd.xlane.f32.xlu0 %v437
  %v439 = vpop.xlane.xlu0 %438
  %v440 = vsel %vm78, %v306, 0.0
  %441 = vadd.xlane.f32.xlu0 %v440
  %v442 = vpop.xlane.xlu0 %441
  %v443 = vsel %vm78, %v307, 0.0
  %444 = vadd.xlane.f32.xlu0 %v443
  %v445 = vpop.xlane.xlu0 %444
  %v446 = vsel %vm78, %v308, 0.0
  %447 = vadd.xlane.f32.xlu0 %v446
  %v448 = vpop.xlane.xlu0 %447
  %v449 = vsel %vm78, %v309, 0.0
  %450 = vadd.xlane.f32.xlu0 %v449
  %v451 = vpop.xlane.xlu0 %450
  %v452 = vsel %vm78, %v310, 0.0
  %453 = vadd.xlane.f32.xlu0 %v452
  %v454 = vpop.xlane.xlu0 %453
  %v455 = vsel %vm78, %v311, 0.0
  %456 = vadd.xlane.f32.xlu0 %v455
  %v457 = vpop.xlane.xlu0 %456
  %v458 = vsel %vm78, %v312, 0.0
  %459 = vadd.xlane.f32.xlu0 %v458
  %v460 = vpop.xlane.xlu0 %459
  %v461 = vsel %vm78, %v313, 0.0
  %462 = vadd.xlane.f32.xlu0 %v461
  %v463 = vpop.xlane.xlu0 %462
  %v464 = vsel %vm78, %v314, 0.0
  %465 = vadd.xlane.f32.xlu0 %v464
  %v466 = vpop.xlane.xlu0 %465
  %v467 = vsel %vm78, %v315, 0.0
  %468 = vadd.xlane.f32.xlu0 %v467
  %v469 = vpop.xlane.xlu0 %468
  %v470 = vsel %vm78, %v316, 0.0
  %471 = vadd.xlane.f32.xlu0 %v470
  %v472 = vpop.xlane.xlu0 %471
  %v473 = vsel %vm78, %v317, 0.0
  %474 = vadd.xlane.f32.xlu0 %v473
  %v475 = vpop.xlane.xlu0 %474
  %v476 = vsel %vm78, %v318, 0.0
  %477 = vadd.xlane.f32.xlu0 %v476
  %v478 = vpop.xlane.xlu0 %477
  %v479 = vsel %vm78, %v319, 0.0
  %480 = vadd.xlane.f32.xlu0 %v479
  %v481 = vpop.xlane.xlu0 %480
  %v482 = vsel %vm78, %v320, 0.0
  %483 = vadd.xlane.f32.xlu0 %v482
  %v484 = vpop.xlane.xlu0 %483
  %v485 = vsel %vm78, %v321, 0.0
  %486 = vadd.xlane.f32.xlu0 %v485
  %v487 = vpop.xlane.xlu0 %486
  %v488 = vsel %vm78, %v322, 0.0
  %489 = vadd.xlane.f32.xlu0 %v488
  %v490 = vpop.xlane.xlu0 %489
  %v491 = vsel %vm78, %v323, 0.0
  %492 = vadd.xlane.f32.xlu0 %v491
  %v493 = vpop.xlane.xlu0 %492
  %v494 = vsel %vm78, %v324, 0.0
  %495 = vadd.xlane.f32.xlu0 %v494
  %v496 = vpop.xlane.xlu0 %495
  %v497 = vsel %vm78, %v325, 0.0
  %498 = vadd.xlane.f32.xlu0 %v497
  %v499 = vpop.xlane.xlu0 %498
  %v500 = vsel %vm78, %v326, 0.0
  %501 = vadd.xlane.f32.xlu0 %v500
  %v502 = vpop.xlane.xlu0 %501
  %v503 = vsel %vm78, %v327, 0.0
  %504 = vadd.xlane.f32.xlu0 %v503
  %v505 = vpop.xlane.xlu0 %504
  %v506 = vsel %vm78, %v328, 0.0
  %507 = vadd.xlane.f32.xlu0 %v506
  %v508 = vpop.xlane.xlu0 %507
  %v509 = vsel %vm78, %v329, 0.0
  %510 = vadd.xlane.f32.xlu0 %v509
  %v511 = vpop.xlane.xlu0 %510
  %v512 = vsel %vm78, %v330, 0.0
  %513 = vadd.xlane.f32.xlu0 %v512
  %v514 = vpop.xlane.xlu0 %513
  %v515 = vsel %vm78, %v331, 0.0
  %516 = vadd.xlane.f32.xlu0 %v515
  %v517 = vpop.xlane.xlu0 %516
  %v518 = vsel %vm78, %v332, 0.0
  %519 = vadd.xlane.f32.xlu0 %v518
  %v520 = vpop.xlane.xlu0 %519
  %v521 = vsel %vm78, %v333, 0.0
  %522 = vadd.xlane.f32.xlu0 %v521
  %v523 = vpop.xlane.xlu0 %522
  %v524 = vsel %vm78, %v334, 0.0
  %525 = vadd.xlane.f32.xlu0 %v524
  %v526 = vpop.xlane.xlu0 %525
  %v527 = vmul.f32 %v81, 0.020408163
  %v528 = vmul.f32 %v84, 0.020408163
  %v529 = vmul.f32 %v87, 0.020408163
  %v530 = vmul.f32 %v90, 0.020408163
  %v531 = vmul.f32 %v93, 0.020408163
  %v532 = vmul.f32 %v96, 0.020408163
  %v533 = vmul.f32 %v99, 0.020408163
  %v534 = vmul.f32 %v102, 0.020408163
  %v535 = vmul.f32 %v105, 0.020408163
  %v536 = vmul.f32 %v108, 0.020408163
  %v537 = vmul.f32 %v111, 0.020408163
  %v538 = vmul.f32 %v114, 0.020408163
  %v539 = vmul.f32 %v117, 0.020408163
  %v540 = vmul.f32 %v120, 0.020408163
  %v541 = vmul.f32 %v123, 0.020408163
  %v542 = vmul.f32 %v126, 0.020408163
  %v543 = vmul.f32 %v129, 0.020408163
  %v544 = vmul.f32 %v132, 0.020408163
  %v545 = vmul.f32 %v135, 0.020408163
  %v546 = vmul.f32 %v138, 0.020408163
  %v547 = vmul.f32 %v141, 0.020408163
  %v548 = vmul.f32 %v144, 0.020408163
  %v549 = vmul.f32 %v147, 0.020408163
  %v550 = vmul.f32 %v150, 0.020408163
  %v551 = vmul.f32 %v153, 0.020408163
  %v552 = vmul.f32 %v156, 0.020408163
  %v553 = vmul.f32 %v159, 0.020408163
  %v554 = vmul.f32 %v162, 0.020408163
  %v555 = vmul.f32 %v165, 0.020408163
  %v556 = vmul.f32 %v168, 0.020408163
  %v557 = vmul.f32 %v171, 0.020408163
  %v558 = vmul.f32 %v174, 0.020408163
  %v559 = vmul.f32 %v177, 0.020408163
  %v560 = vmul.f32 %v180, 0.020408163
  %v561 = vmul.f32 %v183, 0.020408163
  %v562 = vmul.f32 %v186, 0.020408163
  %v563 = vmul.f32 %v189, 0.020408163
  %v564 = vmul.f32 %v192, 0.020408163
  %v565 = vmul.f32 %v195, 0.020408163
  %v566 = vmul.f32 %v198, 0.020408163
  %v567 = vmul.f32 %v201, 0.020408163
  %v568 = vmul.f32 %v204, 0.020408163
  %v569 = vmul.f32 %v207, 0.020408163
  %v570 = vmul.f32 %v210, 0.020408163
  %v571 = vmul.f32 %v213, 0.020408163
  %v572 = vmul.f32 %v216, 0.020408163
  %v573 = vmul.f32 %v219, 0.020408163
  %v574 = vmul.f32 %v222, 0.020408163
  %v575 = vmul.f32 %v225, 0.020408163
  %v576 = vmul.f32 %v228, 0.020408163
  %v577 = vmul.f32 %v231, 0.020408163
  %v578 = vmul.f32 %v234, 0.020408163
  %v579 = vmul.f32 %v237, 0.020408163
  %v580 = vmul.f32 %v240, 0.020408163
  %v581 = vmul.f32 %v243, 0.020408163
  %v582 = vmul.f32 %v246, 0.020408163
  %v583 = vmul.f32 %v249, 0.020408163
  %v584 = vmul.f32 %v252, 0.020408163
  %v585 = vmul.f32 %v255, 0.020408163
  %v586 = vmul.f32 %v258, 0.020408163
  %v587 = vmul.f32 %v261, 0.020408163
  %v588 = vmul.f32 %v264, 0.020408163
  %v589 = vmul.f32 %v267, 0.020408163
  %v590 = vmul.f32 %v270, 0.020408163
  %v591 = vmul.f32 %v337, 0.020408163
  %v592 = vmul.f32 %v340, 0.020408163
  %v593 = vmul.f32 %v343, 0.020408163
  %v594 = vmul.f32 %v346, 0.020408163
  %v595 = vmul.f32 %v349, 0.020408163
  %v596 = vmul.f32 %v352, 0.020408163
  %v597 = vmul.f32 %v355, 0.020408163
  %v598 = vmul.f32 %v358, 0.020408163
  %v599 = vmul.f32 %v361, 0.020408163
  %v600 = vmul.f32 %v364, 0.020408163
  %v601 = vmul.f32 %v367, 0.020408163
  %v602 = vmul.f32 %v370, 0.020408163
  %v603 = vmul.f32 %v373, 0.020408163
  %v604 = vmul.f32 %v376, 0.020408163
  %v605 = vmul.f32 %v379, 0.020408163
  %v606 = vmul.f32 %v382, 0.020408163
  %v607 = vmul.f32 %v385, 0.020408163
  %v608 = vmul.f32 %v388, 0.020408163
  %v609 = vmul.f32 %v391, 0.020408163
  %v610 = vmul.f32 %v394, 0.020408163
  %v611 = vmul.f32 %v397, 0.020408163
  %v612 = vmul.f32 %v400, 0.020408163
  %v613 = vmul.f32 %v403, 0.020408163
  %v614 = vmul.f32 %v406, 0.020408163
  %v615 = vmul.f32 %v409, 0.020408163
  %v616 = vmul.f32 %v412, 0.020408163
  %v617 = vmul.f32 %v415, 0.020408163
  %v618 = vmul.f32 %v418, 0.020408163
  %v619 = vmul.f32 %v421, 0.020408163
  %v620 = vmul.f32 %v424, 0.020408163
  %v621 = vmul.f32 %v427, 0.020408163
  %v622 = vmul.f32 %v430, 0.020408163
  %v623 = vmul.f32 %v433, 0.020408163
  %v624 = vmul.f32 %v436, 0.020408163
  %v625 = vmul.f32 %v439, 0.020408163
  %v626 = vmul.f32 %v442, 0.020408163
  %v627 = vmul.f32 %v445, 0.020408163
  %v628 = vmul.f32 %v448, 0.020408163
  %v629 = vmul.f32 %v451, 0.020408163
  %v630 = vmul.f32 %v454, 0.020408163
  %v631 = vmul.f32 %v457, 0.020408163
  %v632 = vmul.f32 %v460, 0.020408163
  %v633 = vmul.f32 %v463, 0.020408163
  %v634 = vmul.f32 %v466, 0.020408163
  %v635 = vmul.f32 %v469, 0.020408163
  %v636 = vmul.f32 %v472, 0.020408163
  %v637 = vmul.f32 %v475, 0.020408163
  %v638 = vmul.f32 %v478, 0.020408163
  %v639 = vmul.f32 %v481, 0.020408163
  %v640 = vmul.f32 %v484, 0.020408163
  %v641 = vmul.f32 %v487, 0.020408163
  %v642 = vmul.f32 %v490, 0.020408163
  %v643 = vmul.f32 %v493, 0.020408163
  %v644 = vmul.f32 %v496, 0.020408163
  %v645 = vmul.f32 %v499, 0.020408163
  %v646 = vmul.f32 %v502, 0.020408163
  %v647 = vmul.f32 %v505, 0.020408163
  %v648 = vmul.f32 %v508, 0.020408163
  %v649 = vmul.f32 %v511, 0.020408163
  %v650 = vmul.f32 %v514, 0.020408163
  %v651 = vmul.f32 %v517, 0.020408163
  %v652 = vmul.f32 %v520, 0.020408163
  %v653 = vmul.f32 %v523, 0.020408163
  %v654 = vmul.f32 %v526, 0.020408163
  %v655 = vmul.f32 %v527, %v527
  %v656 = vmul.f32 %v528, %v528
  %v657 = vmul.f32 %v529, %v529
  %v658 = vmul.f32 %v530, %v530
  %v659 = vmul.f32 %v531, %v531
  %v660 = vmul.f32 %v532, %v532
  %v661 = vmul.f32 %v533, %v533
  %v662 = vmul.f32 %v534, %v534
  %v663 = vmul.f32 %v535, %v535
  %v664 = vmul.f32 %v536, %v536
  %v665 = vmul.f32 %v537, %v537
  %v666 = vmul.f32 %v538, %v538
  %v667 = vmul.f32 %v539, %v539
  %v668 = vmul.f32 %v540, %v540
  %v669 = vmul.f32 %v541, %v541
  %v670 = vmul.f32 %v542, %v542
  %v671 = vmul.f32 %v543, %v543
  %v672 = vmul.f32 %v544, %v544
  %v673 = vmul.f32 %v545, %v545
  %v674 = vmul.f32 %v546, %v546
  %v675 = vmul.f32 %v547, %v547
  %v676 = vmul.f32 %v548, %v548
  %v677 = vmul.f32 %v549, %v549
  %v678 = vmul.f32 %v550, %v550
  %v679 = vmul.f32 %v551, %v551
  %v680 = vmul.f32 %v552, %v552
  %v681 = vmul.f32 %v553, %v553
  %v682 = vmul.f32 %v554, %v554
  %v683 = vmul.f32 %v555, %v555
  %v684 = vmul.f32 %v556, %v556
  %v685 = vmul.f32 %v557, %v557
  %v686 = vmul.f32 %v558, %v558
  %v687 = vmul.f32 %v559, %v559
  %v688 = vmul.f32 %v560, %v560
  %v689 = vmul.f32 %v561, %v561
  %v690 = vmul.f32 %v562, %v562
  %v691 = vmul.f32 %v563, %v563
  %v692 = vmul.f32 %v564, %v564
  %v693 = vmul.f32 %v565, %v565
  %v694 = vmul.f32 %v566, %v566
  %v695 = vmul.f32 %v567, %v567
  %v696 = vmul.f32 %v568, %v568
  %v697 = vmul.f32 %v569, %v569
  %v698 = vmul.f32 %v570, %v570
  %v699 = vmul.f32 %v571, %v571
  %v700 = vmul.f32 %v572, %v572
  %v701 = vmul.f32 %v573, %v573
  %v702 = vmul.f32 %v574, %v574
  %v703 = vmul.f32 %v575, %v575
  %v704 = vmul.f32 %v576, %v576
  %v705 = vmul.f32 %v577, %v577
  %v706 = vmul.f32 %v578, %v578
  %v707 = vmul.f32 %v579, %v579
  %v708 = vmul.f32 %v580, %v580
  %v709 = vmul.f32 %v581, %v581
  %v710 = vmul.f32 %v582, %v582
  %v711 = vmul.f32 %v583, %v583
  %v712 = vmul.f32 %v584, %v584
  %v713 = vmul.f32 %v585, %v585
  %v714 = vmul.f32 %v586, %v586
  %v715 = vmul.f32 %v587, %v587
  %v716 = vmul.f32 %v588, %v588
  %v717 = vmul.f32 %v589, %v589
  %v718 = vmul.f32 %v590, %v590
  %v719 = vsub.f32 %v591, %v655
  %v720 = vsub.f32 %v592, %v656
  %v721 = vsub.f32 %v593, %v657
  %v722 = vsub.f32 %v594, %v658
  %v723 = vsub.f32 %v595, %v659
  %v724 = vsub.f32 %v596, %v660
  %v725 = vsub.f32 %v597, %v661
  %v726 = vsub.f32 %v598, %v662
  %v727 = vsub.f32 %v599, %v663
  %v728 = vsub.f32 %v600, %v664
  %v729 = vsub.f32 %v601, %v665
  %v730 = vsub.f32 %v602, %v666
  %v731 = vsub.f32 %v603, %v667
  %v732 = vsub.f32 %v604, %v668
  %v733 = vsub.f32 %v605, %v669
  %v734 = vsub.f32 %v606, %v670
  %v735 = vsub.f32 %v607, %v671
  %v736 = vsub.f32 %v608, %v672
  %v737 = vsub.f32 %v609, %v673
  %v738 = vsub.f32 %v610, %v674
  %v739 = vsub.f32 %v611, %v675
  %v740 = vsub.f32 %v612, %v676
  %v741 = vsub.f32 %v613, %v677
  %v742 = vsub.f32 %v614, %v678
  %v743 = vsub.f32 %v615, %v679
  %v744 = vsub.f32 %v616, %v680
  %v745 = vsub.f32 %v617, %v681
  %v746 = vsub.f32 %v618, %v682
  %v747 = vsub.f32 %v619, %v683
  %v748 = vsub.f32 %v620, %v684
  %v749 = vsub.f32 %v621, %v685
  %v750 = vsub.f32 %v622, %v686
  %v751 = vsub.f32 %v623, %v687
  %v752 = vsub.f32 %v624, %v688
  %v753 = vsub.f32 %v625, %v689
  %v754 = vsub.f32 %v626, %v690
  %v755 = vsub.f32 %v627, %v691
  %v756 = vsub.f32 %v628, %v692
  %v757 = vsub.f32 %v629, %v693
  %v758 = vsub.f32 %v630, %v694
  %v759 = vsub.f32 %v631, %v695
  %v760 = vsub.f32 %v632, %v696
  %v761 = vsub.f32 %v633, %v697
  %v762 = vsub.f32 %v634, %v698
  %v763 = vsub.f32 %v635, %v699
  %v764 = vsub.f32 %v636, %v700
  %v765 = vsub.f32 %v637, %v701
  %v766 = vsub.f32 %v638, %v702
  %v767 = vsub.f32 %v639, %v703
  %v768 = vsub.f32 %v640, %v704
  %v769 = vsub.f32 %v641, %v705
  %v770 = vsub.f32 %v642, %v706
  %v771 = vsub.f32 %v643, %v707
  %v772 = vsub.f32 %v644, %v708
  %v773 = vsub.f32 %v645, %v709
  %v774 = vsub.f32 %v646, %v710
  %v775 = vsub.f32 %v647, %v711
  %v776 = vsub.f32 %v648, %v712
  %v777 = vsub.f32 %v649, %v713
  %v778 = vsub.f32 %v650, %v714
  %v779 = vsub.f32 %v651, %v715
  %v780 = vsub.f32 %v652, %v716
  %v781 = vsub.f32 %v653, %v717
  %v782 = vsub.f32 %v654, %v718
  %v783 = vmax.f32 %v719, 0.0
  %v784 = vmax.f32 %v720, 0.0
  %v785 = vmax.f32 %v721, 0.0
  %v786 = vmax.f32 %v722, 0.0
  %v787 = vmax.f32 %v723, 0.0
  %v788 = vmax.f32 %v724, 0.0
  %v789 = vmax.f32 %v725, 0.0
  %v790 = vmax.f32 %v726, 0.0
  %v791 = vmax.f32 %v727, 0.0
  %v792 = vmax.f32 %v728, 0.0
  %v793 = vmax.f32 %v729, 0.0
  %v794 = vmax.f32 %v730, 0.0
  %v795 = vmax.f32 %v731, 0.0
  %v796 = vmax.f32 %v732, 0.0
  %v797 = vmax.f32 %v733, 0.0
  %v798 = vmax.f32 %v734, 0.0
  %v799 = vmax.f32 %v735, 0.0
  %v800 = vmax.f32 %v736, 0.0
  %v801 = vmax.f32 %v737, 0.0
  %v802 = vmax.f32 %v738, 0.0
  %v803 = vmax.f32 %v739, 0.0
  %v804 = vmax.f32 %v740, 0.0
  %v805 = vmax.f32 %v741, 0.0
  %v806 = vmax.f32 %v742, 0.0
  %v807 = vmax.f32 %v743, 0.0
  %v808 = vmax.f32 %v744, 0.0
  %v809 = vmax.f32 %v745, 0.0
  %v810 = vmax.f32 %v746, 0.0
  %v811 = vmax.f32 %v747, 0.0
  %v812 = vmax.f32 %v748, 0.0
  %v813 = vmax.f32 %v749, 0.0
  %v814 = vmax.f32 %v750, 0.0
  %v815 = vmax.f32 %v751, 0.0
  %v816 = vmax.f32 %v752, 0.0
  %v817 = vmax.f32 %v753, 0.0
  %v818 = vmax.f32 %v754, 0.0
  %v819 = vmax.f32 %v755, 0.0
  %v820 = vmax.f32 %v756, 0.0
  %v821 = vmax.f32 %v757, 0.0
  %v822 = vmax.f32 %v758, 0.0
  %v823 = vmax.f32 %v759, 0.0
  %v824 = vmax.f32 %v760, 0.0
  %v825 = vmax.f32 %v761, 0.0
  %v826 = vmax.f32 %v762, 0.0
  %v827 = vmax.f32 %v763, 0.0
  %v828 = vmax.f32 %v764, 0.0
  %v829 = vmax.f32 %v765, 0.0
  %v830 = vmax.f32 %v766, 0.0
  %v831 = vmax.f32 %v767, 0.0
  %v832 = vmax.f32 %v768, 0.0
  %v833 = vmax.f32 %v769, 0.0
  %v834 = vmax.f32 %v770, 0.0
  %v835 = vmax.f32 %v771, 0.0
  %v836 = vmax.f32 %v772, 0.0
  %v837 = vmax.f32 %v773, 0.0
  %v838 = vmax.f32 %v774, 0.0
  %v839 = vmax.f32 %v775, 0.0
  %v840 = vmax.f32 %v776, 0.0
  %v841 = vmax.f32 %v777, 0.0
  %v842 = vmax.f32 %v778, 0.0
  %v843 = vmax.f32 %v779, 0.0
  %v844 = vmax.f32 %v780, 0.0
  %v845 = vmax.f32 %v781, 0.0
  %v846 = vmax.f32 %v782, 0.0
  %v847 = vadd.f32 %v783, 1e-05
  %v848 = vadd.f32 %v784, 1e-05
  %v849 = vadd.f32 %v785, 1e-05
  %v850 = vadd.f32 %v786, 1e-05
  %v851 = vadd.f32 %v787, 1e-05
  %v852 = vadd.f32 %v788, 1e-05
  %v853 = vadd.f32 %v789, 1e-05
  %v854 = vadd.f32 %v790, 1e-05
  %v855 = vadd.f32 %v791, 1e-05
  %v856 = vadd.f32 %v792, 1e-05
  %v857 = vadd.f32 %v793, 1e-05
  %v858 = vadd.f32 %v794, 1e-05
  %v859 = vadd.f32 %v795, 1e-05
  %v860 = vadd.f32 %v796, 1e-05
  %v861 = vadd.f32 %v797, 1e-05
  %v862 = vadd.f32 %v798, 1e-05
  %v863 = vadd.f32 %v799, 1e-05
  %v864 = vadd.f32 %v800, 1e-05
  %v865 = vadd.f32 %v801, 1e-05
  %v866 = vadd.f32 %v802, 1e-05
  %v867 = vadd.f32 %v803, 1e-05
  %v868 = vadd.f32 %v804, 1e-05
  %v869 = vadd.f32 %v805, 1e-05
  %v870 = vadd.f32 %v806, 1e-05
  %v871 = vadd.f32 %v807, 1e-05
  %v872 = vadd.f32 %v808, 1e-05
  %v873 = vadd.f32 %v809, 1e-05
  %v874 = vadd.f32 %v810, 1e-05
  %v875 = vadd.f32 %v811, 1e-05
  %v876 = vadd.f32 %v812, 1e-05
  %v877 = vadd.f32 %v813, 1e-05
  %v878 = vadd.f32 %v814, 1e-05
  %v879 = vadd.f32 %v815, 1e-05
  %v880 = vadd.f32 %v816, 1e-05
  %v881 = vadd.f32 %v817, 1e-05
  %v882 = vadd.f32 %v818, 1e-05
  %v883 = vadd.f32 %v819, 1e-05
  %v884 = vadd.f32 %v820, 1e-05
  %v885 = vadd.f32 %v821, 1e-05
  %v886 = vadd.f32 %v822, 1e-05
  %v887 = vadd.f32 %v823, 1e-05
  %v888 = vadd.f32 %v824, 1e-05
  %v889 = vadd.f32 %v825, 1e-05
  %v890 = vadd.f32 %v826, 1e-05
  %v891 = vadd.f32 %v827, 1e-05
  %v892 = vadd.f32 %v828, 1e-05
  %v893 = vadd.f32 %v829, 1e-05
  %v894 = vadd.f32 %v830, 1e-05
  %v895 = vadd.f32 %v831, 1e-05
  %v896 = vadd.f32 %v832, 1e-05
  %v897 = vadd.f32 %v833, 1e-05
  %v898 = vadd.f32 %v834, 1e-05
  %v899 = vadd.f32 %v835, 1e-05
  %v900 = vadd.f32 %v836, 1e-05
  %v901 = vadd.f32 %v837, 1e-05
  %v902 = vadd.f32 %v838, 1e-05
  %v903 = vadd.f32 %v839, 1e-05
  %v904 = vadd.f32 %v840, 1e-05
  %v905 = vadd.f32 %v841, 1e-05
  %v906 = vadd.f32 %v842, 1e-05
  %v907 = vadd.f32 %v843, 1e-05
  %v908 = vadd.f32 %v844, 1e-05
  %v909 = vadd.f32 %v845, 1e-05
  %v910 = vadd.f32 %v846, 1e-05
  %v911 = vrsqrt.pop %v847
  %v912 = vrsqrt.pop %v848
  %v913 = vrsqrt.pop %v849
  %v914 = vrsqrt.pop %v850
  %v915 = vrsqrt.pop %v851
  %v916 = vrsqrt.pop %v852
  %v917 = vrsqrt.pop %v853
  %v918 = vrsqrt.pop %v854
  %v919 = vrsqrt.pop %v855
  %v920 = vrsqrt.pop %v856
  %v921 = vrsqrt.pop %v857
  %v922 = vrsqrt.pop %v858
  %v923 = vrsqrt.pop %v859
  %v924 = vrsqrt.pop %v860
  %v925 = vrsqrt.pop %v861
  %v926 = vrsqrt.pop %v862
  %v927 = vrsqrt.pop %v863
  %v928 = vrsqrt.pop %v864
  %v929 = vrsqrt.pop %v865
  %v930 = vrsqrt.pop %v866
  %v931 = vrsqrt.pop %v867
  %v932 = vrsqrt.pop %v868
  %v933 = vrsqrt.pop %v869
  %v934 = vrsqrt.pop %v870
  %v935 = vrsqrt.pop %v871
  %v936 = vrsqrt.pop %v872
  %v937 = vrsqrt.pop %v873
  %v938 = vrsqrt.pop %v874
  %v939 = vrsqrt.pop %v875
  %v940 = vrsqrt.pop %v876
  %v941 = vrsqrt.pop %v877
  %v942 = vrsqrt.pop %v878
  %v943 = vrsqrt.pop %v879
  %v944 = vrsqrt.pop %v880
  %v945 = vrsqrt.pop %v881
  %v946 = vrsqrt.pop %v882
  %v947 = vrsqrt.pop %v883
  %v948 = vrsqrt.pop %v884
  %v949 = vrsqrt.pop %v885
  %v950 = vrsqrt.pop %v886
  %v951 = vrsqrt.pop %v887
  %v952 = vrsqrt.pop %v888
  %v953 = vrsqrt.pop %v889
  %v954 = vrsqrt.pop %v890
  %v955 = vrsqrt.pop %v891
  %v956 = vrsqrt.pop %v892
  %v957 = vrsqrt.pop %v893
  %v958 = vrsqrt.pop %v894
  %v959 = vrsqrt.pop %v895
  %v960 = vrsqrt.pop %v896
  %v961 = vrsqrt.pop %v897
  %v962 = vrsqrt.pop %v898
  %v963 = vrsqrt.pop %v899
  %v964 = vrsqrt.pop %v900
  %v965 = vrsqrt.pop %v901
  %v966 = vrsqrt.pop %v902
  %v967 = vrsqrt.pop %v903
  %v968 = vrsqrt.pop %v904
  %v969 = vrsqrt.pop %v905
  %v970 = vrsqrt.pop %v906
  %v971 = vrsqrt.pop %v907
  %v972 = vrsqrt.pop %v908
  %v973 = vrsqrt.pop %v909
  %v974 = vrsqrt.pop %v910
  %v975 = vld [vmem:[%s1] sm:$0xff]
  %v976 = vld [vmem:[%s1 + $0x8] sm:$0xff]
  %v977 = vld [vmem:[%s1 + $0x10] sm:$0xff]
  %v978 = vld [vmem:[%s1 + $0x18] sm:$0xff]
  %v979 = vld [vmem:[%s1 + $0x20] sm:$0xff]
  %v980 = vld [vmem:[%s1 + $0x28] sm:$0xff]
  %v981 = vld [vmem:[%s1 + $0x30] sm:$0xff]
  %v982 = vld [vmem:[%s1 + $0x38] sm:$0xff]
  %v983 = vld [vmem:[%s1 + $0x40] sm:$0xff]
  %v984 = vld [vmem:[%s1 + $0x48] sm:$0xff]
  %v985 = vld [vmem:[%s1 + $0x50] sm:$0xff]
  %v986 = vld [vmem:[%s1 + $0x58] sm:$0xff]
  %v987 = vld [vmem:[%s1 + $0x60] sm:$0xff]
  %v988 = vld [vmem:[%s1 + $0x68] sm:$0xff]
  %v989 = vld [vmem:[%s1 + $0x70] sm:$0xff]
  %v990 = vld [vmem:[%s1 + $0x78] sm:$0xff]
  %v991 = vld [vmem:[%s1 + $0x80] sm:$0xff]
  %v992 = vld [vmem:[%s1 + $0x88] sm:$0xff]
  %v993 = vld [vmem:[%s1 + $0x90] sm:$0xff]
  %v994 = vld [vmem:[%s1 + $0x98] sm:$0xff]
  %v995 = vld [vmem:[%s1 + $0xa0] sm:$0xff]
  %v996 = vld [vmem:[%s1 + $0xa8] sm:$0xff]
  %v997 = vld [vmem:[%s1 + $0xb0] sm:$0xff]
  %v998 = vld [vmem:[%s1 + $0xb8] sm:$0xff]
  %v999 = vld [vmem:[%s1 + $0xc0] sm:$0xff]
  %v1000 = vld [vmem:[%s1 + $0xc8] sm:$0xff]
  %v1001 = vld [vmem:[%s1 + $0xd0] sm:$0xff]
  %v1002 = vld [vmem:[%s1 + $0xd8] sm:$0xff]
  %v1003 = vld [vmem:[%s1 + $0xe0] sm:$0xff]
  %v1004 = vld [vmem:[%s1 + $0xe8] sm:$0xff]
  %v1005 = vld [vmem:[%s1 + $0xf0] sm:$0xff]
  %v1006 = vld [vmem:[%s1 + $0xf8] sm:$0xff]
  %v1007 = vld [vmem:[%s1 + $0x100] sm:$0xff]
  %v1008 = vld [vmem:[%s1 + $0x108] sm:$0xff]
  %v1009 = vld [vmem:[%s1 + $0x110] sm:$0xff]
  %v1010 = vld [vmem:[%s1 + $0x118] sm:$0xff]
  %v1011 = vld [vmem:[%s1 + $0x120] sm:$0xff]
  %v1012 = vld [vmem:[%s1 + $0x128] sm:$0xff]
  %v1013 = vld [vmem:[%s1 + $0x130] sm:$0xff]
  %v1014 = vld [vmem:[%s1 + $0x138] sm:$0xff]
  %v1015 = vld [vmem:[%s1 + $0x140] sm:$0xff]
  %v1016 = vld [vmem:[%s1 + $0x148] sm:$0xff]
  %v1017 = vld [vmem:[%s1 + $0x150] sm:$0xff]
  %v1018 = vld [vmem:[%s1 + $0x158] sm:$0xff]
  %v1019 = vld [vmem:[%s1 + $0x160] sm:$0xff]
  %v1020 = vld [vmem:[%s1 + $0x168] sm:$0xff]
  %v1021 = vld [vmem:[%s1 + $0x170] sm:$0xff]
  %v1022 = vld [vmem:[%s1 + $0x178] sm:$0xff]
  %v1023 = vld [vmem:[%s1 + $0x180] sm:$0xff]
  %v1024 = vld [vmem:[%s1 + $0x188] sm:$0xff]
  %v1025 = vld [vmem:[%s1 + $0x190] sm:$0xff]
  %v1026 = vld [vmem:[%s1 + $0x198] sm:$0xff]
  %v1027 = vld [vmem:[%s1 + $0x1a0] sm:$0xff]
  %v1028 = vld [vmem:[%s1 + $0x1a8] sm:$0xff]
  %v1029 = vld [vmem:[%s1 + $0x1b0] sm:$0xff]
  %v1030 = vld [vmem:[%s1 + $0x1b8] sm:$0xff]
  %v1031 = vld [vmem:[%s1 + $0x1c0] sm:$0xff]
  %v1032 = vld [vmem:[%s1 + $0x1c8] sm:$0xff]
  %v1033 = vld [vmem:[%s1 + $0x1d0] sm:$0xff]
  %v1034 = vld [vmem:[%s1 + $0x1d8] sm:$0xff]
  %v1035 = vld [vmem:[%s1 + $0x1e0] sm:$0xff]
  %v1036 = vld [vmem:[%s1 + $0x1e8] sm:$0xff]
  %v1037 = vld [vmem:[%s1 + $0x1f0] sm:$0xff]
  %v1038 = vld [vmem:[%s1 + $0x1f8] sm:$0xff]
  %v1039 = vmul.f32 %v911, %v975
  %v1040 = vmul.f32 %v912, %v976
  %v1041 = vmul.f32 %v913, %v977
  %v1042 = vmul.f32 %v914, %v978
  %v1043 = vmul.f32 %v915, %v979
  %v1044 = vmul.f32 %v916, %v980
  %v1045 = vmul.f32 %v917, %v981
  %v1046 = vmul.f32 %v918, %v982
  %v1047 = vmul.f32 %v919, %v983
  %v1048 = vmul.f32 %v920, %v984
  %v1049 = vmul.f32 %v921, %v985
  %v1050 = vmul.f32 %v922, %v986
  %v1051 = vmul.f32 %v923, %v987
  %v1052 = vmul.f32 %v924, %v988
  %v1053 = vmul.f32 %v925, %v989
  %v1054 = vmul.f32 %v926, %v990
  %v1055 = vmul.f32 %v927, %v991
  %v1056 = vmul.f32 %v928, %v992
  %v1057 = vmul.f32 %v929, %v993
  %v1058 = vmul.f32 %v930, %v994
  %v1059 = vmul.f32 %v931, %v995
  %v1060 = vmul.f32 %v932, %v996
  %v1061 = vmul.f32 %v933, %v997
  %v1062 = vmul.f32 %v934, %v998
  %v1063 = vmul.f32 %v935, %v999
  %v1064 = vmul.f32 %v936, %v1000
  %v1065 = vmul.f32 %v937, %v1001
  %v1066 = vmul.f32 %v938, %v1002
  %v1067 = vmul.f32 %v939, %v1003
  %v1068 = vmul.f32 %v940, %v1004
  %v1069 = vmul.f32 %v941, %v1005
  %v1070 = vmul.f32 %v942, %v1006
  %v1071 = vmul.f32 %v943, %v1007
  %v1072 = vmul.f32 %v944, %v1008
  %v1073 = vmul.f32 %v945, %v1009
  %v1074 = vmul.f32 %v946, %v1010
  %v1075 = vmul.f32 %v947, %v1011
  %v1076 = vmul.f32 %v948, %v1012
  %v1077 = vmul.f32 %v949, %v1013
  %v1078 = vmul.f32 %v950, %v1014
  %v1079 = vmul.f32 %v951, %v1015
  %v1080 = vmul.f32 %v952, %v1016
  %v1081 = vmul.f32 %v953, %v1017
  %v1082 = vmul.f32 %v954, %v1018
  %v1083 = vmul.f32 %v955, %v1019
  %v1084 = vmul.f32 %v956, %v1020
  %v1085 = vmul.f32 %v957, %v1021
  %v1086 = vmul.f32 %v958, %v1022
  %v1087 = vmul.f32 %v959, %v1023
  %v1088 = vmul.f32 %v960, %v1024
  %v1089 = vmul.f32 %v961, %v1025
  %v1090 = vmul.f32 %v962, %v1026
  %v1091 = vmul.f32 %v963, %v1027
  %v1092 = vmul.f32 %v964, %v1028
  %v1093 = vmul.f32 %v965, %v1029
  %v1094 = vmul.f32 %v966, %v1030
  %v1095 = vmul.f32 %v967, %v1031
  %v1096 = vmul.f32 %v968, %v1032
  %v1097 = vmul.f32 %v969, %v1033
  %v1098 = vmul.f32 %v970, %v1034
  %v1099 = vmul.f32 %v971, %v1035
  %v1100 = vmul.f32 %v972, %v1036
  %v1101 = vmul.f32 %v973, %v1037
  %v1102 = vmul.f32 %v974, %v1038
  %v1103 = vld [vmem:[%s2] sm:$0xff]
  %v1104 = vld [vmem:[%s2 + $0x8] sm:$0xff]
  %v1105 = vld [vmem:[%s2 + $0x10] sm:$0xff]
  %v1106 = vld [vmem:[%s2 + $0x18] sm:$0xff]
  %v1107 = vld [vmem:[%s2 + $0x20] sm:$0xff]
  %v1108 = vld [vmem:[%s2 + $0x28] sm:$0xff]
  %v1109 = vld [vmem:[%s2 + $0x30] sm:$0xff]
  %v1110 = vld [vmem:[%s2 + $0x38] sm:$0xff]
  %v1111 = vld [vmem:[%s2 + $0x40] sm:$0xff]
  %v1112 = vld [vmem:[%s2 + $0x48] sm:$0xff]
  %v1113 = vld [vmem:[%s2 + $0x50] sm:$0xff]
  %v1114 = vld [vmem:[%s2 + $0x58] sm:$0xff]
  %v1115 = vld [vmem:[%s2 + $0x60] sm:$0xff]
  %v1116 = vld [vmem:[%s2 + $0x68] sm:$0xff]
  %v1117 = vld [vmem:[%s2 + $0x70] sm:$0xff]
  %v1118 = vld [vmem:[%s2 + $0x78] sm:$0xff]
  %v1119 = vld [vmem:[%s2 + $0x80] sm:$0xff]
  %v1120 = vld [vmem:[%s2 + $0x88] sm:$0xff]
  %v1121 = vld [vmem:[%s2 + $0x90] sm:$0xff]
  %v1122 = vld [vmem:[%s2 + $0x98] sm:$0xff]
  %v1123 = vld [vmem:[%s2 + $0xa0] sm:$0xff]
  %v1124 = vld [vmem:[%s2 + $0xa8] sm:$0xff]
  %v1125 = vld [vmem:[%s2 + $0xb0] sm:$0xff]
  %v1126 = vld [vmem:[%s2 + $0xb8] sm:$0xff]
  %v1127 = vld [vmem:[%s2 + $0xc0] sm:$0xff]
  %v1128 = vld [vmem:[%s2 + $0xc8] sm:$0xff]
  %v1129 = vld [vmem:[%s2 + $0xd0] sm:$0xff]
  %v1130 = vld [vmem:[%s2 + $0xd8] sm:$0xff]
  %v1131 = vld [vmem:[%s2 + $0xe0] sm:$0xff]
  %v1132 = vld [vmem:[%s2 + $0xe8] sm:$0xff]
  %v1133 = vld [vmem:[%s2 + $0xf0] sm:$0xff]
  %v1134 = vld [vmem:[%s2 + $0xf8] sm:$0xff]
  %v1135 = vld [vmem:[%s2 + $0x100] sm:$0xff]
  %v1136 = vld [vmem:[%s2 + $0x108] sm:$0xff]
  %v1137 = vld [vmem:[%s2 + $0x110] sm:$0xff]
  %v1138 = vld [vmem:[%s2 + $0x118] sm:$0xff]
  %v1139 = vld [vmem:[%s2 + $0x120] sm:$0xff]
  %v1140 = vld [vmem:[%s2 + $0x128] sm:$0xff]
  %v1141 = vld [vmem:[%s2 + $0x130] sm:$0xff]
  %v1142 = vld [vmem:[%s2 + $0x138] sm:$0xff]
  %v1143 = vld [vmem:[%s2 + $0x140] sm:$0xff]
  %v1144 = vld [vmem:[%s2 + $0x148] sm:$0xff]
  %v1145 = vld [vmem:[%s2 + $0x150] sm:$0xff]
  %v1146 = vld [vmem:[%s2 + $0x158] sm:$0xff]
  %v1147 = vld [vmem:[%s2 + $0x160] sm:$0xff]
  %v1148 = vld [vmem:[%s2 + $0x168] sm:$0xff]
  %v1149 = vld [vmem:[%s2 + $0x170] sm:$0xff]
  %v1150 = vld [vmem:[%s2 + $0x178] sm:$0xff]
  %v1151 = vld [vmem:[%s2 + $0x180] sm:$0xff]
  %v1152 = vld [vmem:[%s2 + $0x188] sm:$0xff]
  %v1153 = vld [vmem:[%s2 + $0x190] sm:$0xff]
  %v1154 = vld [vmem:[%s2 + $0x198] sm:$0xff]
  %v1155 = vld [vmem:[%s2 + $0x1a0] sm:$0xff]
  %v1156 = vld [vmem:[%s2 + $0x1a8] sm:$0xff]
  %v1157 = vld [vmem:[%s2 + $0x1b0] sm:$0xff]
  %v1158 = vld [vmem:[%s2 + $0x1b8] sm:$0xff]
  %v1159 = vld [vmem:[%s2 + $0x1c0] sm:$0xff]
  %v1160 = vld [vmem:[%s2 + $0x1c8] sm:$0xff]
  %v1161 = vld [vmem:[%s2 + $0x1d0] sm:$0xff]
  %v1162 = vld [vmem:[%s2 + $0x1d8] sm:$0xff]
  %v1163 = vld [vmem:[%s2 + $0x1e0] sm:$0xff]
  %v1164 = vld [vmem:[%s2 + $0x1e8] sm:$0xff]
  %v1165 = vld [vmem:[%s2 + $0x1f0] sm:$0xff]
  %v1166 = vld [vmem:[%s2 + $0x1f8] sm:$0xff]
  %v1167 = vmul.f32 %v527, %v1039
  %v1168 = vmul.f32 %v528, %v1040
  %v1169 = vmul.f32 %v529, %v1041
  %v1170 = vmul.f32 %v530, %v1042
  %v1171 = vmul.f32 %v531, %v1043
  %v1172 = vmul.f32 %v532, %v1044
  %v1173 = vmul.f32 %v533, %v1045
  %v1174 = vmul.f32 %v534, %v1046
  %v1175 = vmul.f32 %v535, %v1047
  %v1176 = vmul.f32 %v536, %v1048
  %v1177 = vmul.f32 %v537, %v1049
  %v1178 = vmul.f32 %v538, %v1050
  %v1179 = vmul.f32 %v539, %v1051
  %v1180 = vmul.f32 %v540, %v1052
  %v1181 = vmul.f32 %v541, %v1053
  %v1182 = vmul.f32 %v542, %v1054
  %v1183 = vmul.f32 %v543, %v1055
  %v1184 = vmul.f32 %v544, %v1056
  %v1185 = vmul.f32 %v545, %v1057
  %v1186 = vmul.f32 %v546, %v1058
  %v1187 = vmul.f32 %v547, %v1059
  %v1188 = vmul.f32 %v548, %v1060
  %v1189 = vmul.f32 %v549, %v1061
  %v1190 = vmul.f32 %v550, %v1062
  %v1191 = vmul.f32 %v551, %v1063
  %v1192 = vmul.f32 %v552, %v1064
  %v1193 = vmul.f32 %v553, %v1065
  %v1194 = vmul.f32 %v554, %v1066
  %v1195 = vmul.f32 %v555, %v1067
  %v1196 = vmul.f32 %v556, %v1068
  %v1197 = vmul.f32 %v557, %v1069
  %v1198 = vmul.f32 %v558, %v1070
  %v1199 = vmul.f32 %v559, %v1071
  %v1200 = vmul.f32 %v560, %v1072
  %v1201 = vmul.f32 %v561, %v1073
  %v1202 = vmul.f32 %v562, %v1074
  %v1203 = vmul.f32 %v563, %v1075
  %v1204 = vmul.f32 %v564, %v1076
  %v1205 = vmul.f32 %v565, %v1077
  %v1206 = vmul.f32 %v566, %v1078
  %v1207 = vmul.f32 %v567, %v1079
  %v1208 = vmul.f32 %v568, %v1080
  %v1209 = vmul.f32 %v569, %v1081
  %v1210 = vmul.f32 %v570, %v1082
  %v1211 = vmul.f32 %v571, %v1083
  %v1212 = vmul.f32 %v572, %v1084
  %v1213 = vmul.f32 %v573, %v1085
  %v1214 = vmul.f32 %v574, %v1086
  %v1215 = vmul.f32 %v575, %v1087
  %v1216 = vmul.f32 %v576, %v1088
  %v1217 = vmul.f32 %v577, %v1089
  %v1218 = vmul.f32 %v578, %v1090
  %v1219 = vmul.f32 %v579, %v1091
  %v1220 = vmul.f32 %v580, %v1092
  %v1221 = vmul.f32 %v581, %v1093
  %v1222 = vmul.f32 %v582, %v1094
  %v1223 = vmul.f32 %v583, %v1095
  %v1224 = vmul.f32 %v584, %v1096
  %v1225 = vmul.f32 %v585, %v1097
  %v1226 = vmul.f32 %v586, %v1098
  %v1227 = vmul.f32 %v587, %v1099
  %v1228 = vmul.f32 %v588, %v1100
  %v1229 = vmul.f32 %v589, %v1101
  %v1230 = vmul.f32 %v590, %v1102
  %v1231 = vsub.f32 %v1103, %v1167
  %v1232 = vsub.f32 %v1104, %v1168
  %v1233 = vsub.f32 %v1105, %v1169
  %v1234 = vsub.f32 %v1106, %v1170
  %v1235 = vsub.f32 %v1107, %v1171
  %v1236 = vsub.f32 %v1108, %v1172
  %v1237 = vsub.f32 %v1109, %v1173
  %v1238 = vsub.f32 %v1110, %v1174
  %v1239 = vsub.f32 %v1111, %v1175
  %v1240 = vsub.f32 %v1112, %v1176
  %v1241 = vsub.f32 %v1113, %v1177
  %v1242 = vsub.f32 %v1114, %v1178
  %v1243 = vsub.f32 %v1115, %v1179
  %v1244 = vsub.f32 %v1116, %v1180
  %v1245 = vsub.f32 %v1117, %v1181
  %v1246 = vsub.f32 %v1118, %v1182
  %v1247 = vsub.f32 %v1119, %v1183
  %v1248 = vsub.f32 %v1120, %v1184
  %v1249 = vsub.f32 %v1121, %v1185
  %v1250 = vsub.f32 %v1122, %v1186
  %v1251 = vsub.f32 %v1123, %v1187
  %v1252 = vsub.f32 %v1124, %v1188
  %v1253 = vsub.f32 %v1125, %v1189
  %v1254 = vsub.f32 %v1126, %v1190
  %v1255 = vsub.f32 %v1127, %v1191
  %v1256 = vsub.f32 %v1128, %v1192
  %v1257 = vsub.f32 %v1129, %v1193
  %v1258 = vsub.f32 %v1130, %v1194
  %v1259 = vsub.f32 %v1131, %v1195
  %v1260 = vsub.f32 %v1132, %v1196
  %v1261 = vsub.f32 %v1133, %v1197
  %v1262 = vsub.f32 %v1134, %v1198
  %v1263 = vsub.f32 %v1135, %v1199
  %v1264 = vsub.f32 %v1136, %v1200
  %v1265 = vsub.f32 %v1137, %v1201
  %v1266 = vsub.f32 %v1138, %v1202
  %v1267 = vsub.f32 %v1139, %v1203
  %v1268 = vsub.f32 %v1140, %v1204
  %v1269 = vsub.f32 %v1141, %v1205
  %v1270 = vsub.f32 %v1142, %v1206
  %v1271 = vsub.f32 %v1143, %v1207
  %v1272 = vsub.f32 %v1144, %v1208
  %v1273 = vsub.f32 %v1145, %v1209
  %v1274 = vsub.f32 %v1146, %v1210
  %v1275 = vsub.f32 %v1147, %v1211
  %v1276 = vsub.f32 %v1148, %v1212
  %v1277 = vsub.f32 %v1149, %v1213
  %v1278 = vsub.f32 %v1150, %v1214
  %v1279 = vsub.f32 %v1151, %v1215
  %v1280 = vsub.f32 %v1152, %v1216
  %v1281 = vsub.f32 %v1153, %v1217
  %v1282 = vsub.f32 %v1154, %v1218
  %v1283 = vsub.f32 %v1155, %v1219
  %v1284 = vsub.f32 %v1156, %v1220
  %v1285 = vsub.f32 %v1157, %v1221
  %v1286 = vsub.f32 %v1158, %v1222
  %v1287 = vsub.f32 %v1159, %v1223
  %v1288 = vsub.f32 %v1160, %v1224
  %v1289 = vsub.f32 %v1161, %v1225
  %v1290 = vsub.f32 %v1162, %v1226
  %v1291 = vsub.f32 %v1163, %v1227
  %v1292 = vsub.f32 %v1164, %v1228
  %v1293 = vsub.f32 %v1165, %v1229
  %v1294 = vsub.f32 %v1166, %v1230
  %1296 = vset.pattern.permute.xlu0 0
  %1297 = vperm.xlu0 %1296, %v1039
  %v1298 = vpop.permute.xlu0 %1297
  %1301 = vset.pattern.permute.xlu0 0
  %1302 = vperm.xlu0 %1301, %v1040
  %v1303 = vpop.permute.xlu0 %1302
  %1306 = vset.pattern.permute.xlu0 0
  %1307 = vperm.xlu0 %1306, %v1041
  %v1308 = vpop.permute.xlu0 %1307
  %1311 = vset.pattern.permute.xlu0 0
  %1312 = vperm.xlu0 %1311, %v1042
  %v1313 = vpop.permute.xlu0 %1312
  %1316 = vset.pattern.permute.xlu0 0
  %1317 = vperm.xlu0 %1316, %v1043
  %v1318 = vpop.permute.xlu0 %1317
  %1321 = vset.pattern.permute.xlu0 0
  %1322 = vperm.xlu0 %1321, %v1044
  %v1323 = vpop.permute.xlu0 %1322
  %1326 = vset.pattern.permute.xlu0 0
  %1327 = vperm.xlu0 %1326, %v1045
  %v1328 = vpop.permute.xlu0 %1327
  %1331 = vset.pattern.permute.xlu0 0
  %1332 = vperm.xlu0 %1331, %v1046
  %v1333 = vpop.permute.xlu0 %1332
  %1336 = vset.pattern.permute.xlu0 0
  %1337 = vperm.xlu0 %1336, %v1047
  %v1338 = vpop.permute.xlu0 %1337
  %1341 = vset.pattern.permute.xlu0 0
  %1342 = vperm.xlu0 %1341, %v1048
  %v1343 = vpop.permute.xlu0 %1342
  %1346 = vset.pattern.permute.xlu0 0
  %1347 = vperm.xlu0 %1346, %v1049
  %v1348 = vpop.permute.xlu0 %1347
  %1351 = vset.pattern.permute.xlu0 0
  %1352 = vperm.xlu0 %1351, %v1050
  %v1353 = vpop.permute.xlu0 %1352
  %1356 = vset.pattern.permute.xlu0 0
  %1357 = vperm.xlu0 %1356, %v1051
  %v1358 = vpop.permute.xlu0 %1357
  %1361 = vset.pattern.permute.xlu0 0
  %1362 = vperm.xlu0 %1361, %v1052
  %v1363 = vpop.permute.xlu0 %1362
  %1366 = vset.pattern.permute.xlu0 0
  %1367 = vperm.xlu0 %1366, %v1053
  %v1368 = vpop.permute.xlu0 %1367
  %1371 = vset.pattern.permute.xlu0 0
  %1372 = vperm.xlu0 %1371, %v1054
  %v1373 = vpop.permute.xlu0 %1372
  %1376 = vset.pattern.permute.xlu0 0
  %1377 = vperm.xlu0 %1376, %v1055
  %v1378 = vpop.permute.xlu0 %1377
  %1381 = vset.pattern.permute.xlu0 0
  %1382 = vperm.xlu0 %1381, %v1056
  %v1383 = vpop.permute.xlu0 %1382
  %1386 = vset.pattern.permute.xlu0 0
  %1387 = vperm.xlu0 %1386, %v1057
  %v1388 = vpop.permute.xlu0 %1387
  %1391 = vset.pattern.permute.xlu0 0
  %1392 = vperm.xlu0 %1391, %v1058
  %v1393 = vpop.permute.xlu0 %1392
  %1396 = vset.pattern.permute.xlu0 0
  %1397 = vperm.xlu0 %1396, %v1059
  %v1398 = vpop.permute.xlu0 %1397
  %1401 = vset.pattern.permute.xlu0 0
  %1402 = vperm.xlu0 %1401, %v1060
  %v1403 = vpop.permute.xlu0 %1402
  %1406 = vset.pattern.permute.xlu0 0
  %1407 = vperm.xlu0 %1406, %v1061
  %v1408 = vpop.permute.xlu0 %1407
  %1411 = vset.pattern.permute.xlu0 0
  %1412 = vperm.xlu0 %1411, %v1062
  %v1413 = vpop.permute.xlu0 %1412
  %1416 = vset.pattern.permute.xlu0 0
  %1417 = vperm.xlu0 %1416, %v1063
  %v1418 = vpop.permute.xlu0 %1417
  %1421 = vset.pattern.permute.xlu0 0
  %1422 = vperm.xlu0 %1421, %v1064
  %v1423 = vpop.permute.xlu0 %1422
  %1426 = vset.pattern.permute.xlu0 0
  %1427 = vperm.xlu0 %1426, %v1065
  %v1428 = vpop.permute.xlu0 %1427
  %1431 = vset.pattern.permute.xlu0 0
  %1432 = vperm.xlu0 %1431, %v1066
  %v1433 = vpop.permute.xlu0 %1432
  %1436 = vset.pattern.permute.xlu0 0
  %1437 = vperm.xlu0 %1436, %v1067
  %v1438 = vpop.permute.xlu0 %1437
  %1441 = vset.pattern.permute.xlu0 0
  %1442 = vperm.xlu0 %1441, %v1068
  %v1443 = vpop.permute.xlu0 %1442
  %1446 = vset.pattern.permute.xlu0 0
  %1447 = vperm.xlu0 %1446, %v1069
  %v1448 = vpop.permute.xlu0 %1447
  %1451 = vset.pattern.permute.xlu0 0
  %1452 = vperm.xlu0 %1451, %v1070
  %v1453 = vpop.permute.xlu0 %1452
  %1456 = vset.pattern.permute.xlu0 0
  %1457 = vperm.xlu0 %1456, %v1071
  %v1458 = vpop.permute.xlu0 %1457
  %1461 = vset.pattern.permute.xlu0 0
  %1462 = vperm.xlu0 %1461, %v1072
  %v1463 = vpop.permute.xlu0 %1462
  %1466 = vset.pattern.permute.xlu0 0
  %1467 = vperm.xlu0 %1466, %v1073
  %v1468 = vpop.permute.xlu0 %1467
  %1471 = vset.pattern.permute.xlu0 0
  %1472 = vperm.xlu0 %1471, %v1074
  %v1473 = vpop.permute.xlu0 %1472
  %1476 = vset.pattern.permute.xlu0 0
  %1477 = vperm.xlu0 %1476, %v1075
  %v1478 = vpop.permute.xlu0 %1477
  %1481 = vset.pattern.permute.xlu0 0
  %1482 = vperm.xlu0 %1481, %v1076
  %v1483 = vpop.permute.xlu0 %1482
  %1486 = vset.pattern.permute.xlu0 0
  %1487 = vperm.xlu0 %1486, %v1077
  %v1488 = vpop.permute.xlu0 %1487
  %1491 = vset.pattern.permute.xlu0 0
  %1492 = vperm.xlu0 %1491, %v1078
  %v1493 = vpop.permute.xlu0 %1492
  %1496 = vset.pattern.permute.xlu0 0
  %1497 = vperm.xlu0 %1496, %v1079
  %v1498 = vpop.permute.xlu0 %1497
  %1501 = vset.pattern.permute.xlu0 0
  %1502 = vperm.xlu0 %1501, %v1080
  %v1503 = vpop.permute.xlu0 %1502
  %1506 = vset.pattern.permute.xlu0 0
  %1507 = vperm.xlu0 %1506, %v1081
  %v1508 = vpop.permute.xlu0 %1507
  %1511 = vset.pattern.permute.xlu0 0
  %1512 = vperm.xlu0 %1511, %v1082
  %v1513 = vpop.permute.xlu0 %1512
  %1516 = vset.pattern.permute.xlu0 0
  %1517 = vperm.xlu0 %1516, %v1083
  %v1518 = vpop.permute.xlu0 %1517
  %1521 = vset.pattern.permute.xlu0 0
  %1522 = vperm.xlu0 %1521, %v1084
  %v1523 = vpop.permute.xlu0 %1522
  %1526 = vset.pattern.permute.xlu0 0
  %1527 = vperm.xlu0 %1526, %v1085
  %v1528 = vpop.permute.xlu0 %1527
  %1531 = vset.pattern.permute.xlu0 0
  %1532 = vperm.xlu0 %1531, %v1086
  %v1533 = vpop.permute.xlu0 %1532
  %1536 = vset.pattern.permute.xlu0 0
  %1537 = vperm.xlu0 %1536, %v1087
  %v1538 = vpop.permute.xlu0 %1537
  %1541 = vset.pattern.permute.xlu0 0
  %1542 = vperm.xlu0 %1541, %v1088
  %v1543 = vpop.permute.xlu0 %1542
  %1546 = vset.pattern.permute.xlu0 0
  %1547 = vperm.xlu0 %1546, %v1089
  %v1548 = vpop.permute.xlu0 %1547
  %1551 = vset.pattern.permute.xlu0 0
  %1552 = vperm.xlu0 %1551, %v1090
  %v1553 = vpop.permute.xlu0 %1552
  %1556 = vset.pattern.permute.xlu0 0
  %1557 = vperm.xlu0 %1556, %v1091
  %v1558 = vpop.permute.xlu0 %1557
  %1561 = vset.pattern.permute.xlu0 0
  %1562 = vperm.xlu0 %1561, %v1092
  %v1563 = vpop.permute.xlu0 %1562
  %1566 = vset.pattern.permute.xlu0 0
  %1567 = vperm.xlu0 %1566, %v1093
  %v1568 = vpop.permute.xlu0 %1567
  %1571 = vset.pattern.permute.xlu0 0
  %1572 = vperm.xlu0 %1571, %v1094
  %v1573 = vpop.permute.xlu0 %1572
  %1576 = vset.pattern.permute.xlu0 0
  %1577 = vperm.xlu0 %1576, %v1095
  %v1578 = vpop.permute.xlu0 %1577
  %1581 = vset.pattern.permute.xlu0 0
  %1582 = vperm.xlu0 %1581, %v1096
  %v1583 = vpop.permute.xlu0 %1582
  %1586 = vset.pattern.permute.xlu0 0
  %1587 = vperm.xlu0 %1586, %v1097
  %v1588 = vpop.permute.xlu0 %1587
  %1591 = vset.pattern.permute.xlu0 0
  %1592 = vperm.xlu0 %1591, %v1098
  %v1593 = vpop.permute.xlu0 %1592
  %1596 = vset.pattern.permute.xlu0 0
  %1597 = vperm.xlu0 %1596, %v1099
  %v1598 = vpop.permute.xlu0 %1597
  %1601 = vset.pattern.permute.xlu0 0
  %1602 = vperm.xlu0 %1601, %v1100
  %v1603 = vpop.permute.xlu0 %1602
  %1606 = vset.pattern.permute.xlu0 0
  %1607 = vperm.xlu0 %1606, %v1101
  %v1608 = vpop.permute.xlu0 %1607
  %1611 = vset.pattern.permute.xlu0 0
  %1612 = vperm.xlu0 %1611, %v1102
  %v1613 = vpop.permute.xlu0 %1612
  %v1615 = vmul.f32 %v14, %v1298
  %v1616 = vmul.f32 %v15, %v1303
  %v1617 = vmul.f32 %v16, %v1308
  %v1618 = vmul.f32 %v17, %v1313
  %v1619 = vmul.f32 %v18, %v1318
  %v1620 = vmul.f32 %v19, %v1323
  %v1621 = vmul.f32 %v20, %v1328
  %v1622 = vmul.f32 %v21, %v1333
  %v1623 = vmul.f32 %v22, %v1338
  %v1624 = vmul.f32 %v23, %v1343
  %v1625 = vmul.f32 %v24, %v1348
  %v1626 = vmul.f32 %v25, %v1353
  %v1627 = vmul.f32 %v26, %v1358
  %v1628 = vmul.f32 %v27, %v1363
  %v1629 = vmul.f32 %v28, %v1368
  %v1630 = vmul.f32 %v29, %v1373
  %v1631 = vmul.f32 %v30, %v1378
  %v1632 = vmul.f32 %v31, %v1383
  %v1633 = vmul.f32 %v32, %v1388
  %v1634 = vmul.f32 %v33, %v1393
  %v1635 = vmul.f32 %v34, %v1398
  %v1636 = vmul.f32 %v35, %v1403
  %v1637 = vmul.f32 %v36, %v1408
  %v1638 = vmul.f32 %v37, %v1413
  %v1639 = vmul.f32 %v38, %v1418
  %v1640 = vmul.f32 %v39, %v1423
  %v1641 = vmul.f32 %v40, %v1428
  %v1642 = vmul.f32 %v41, %v1433
  %v1643 = vmul.f32 %v42, %v1438
  %v1644 = vmul.f32 %v43, %v1443
  %v1645 = vmul.f32 %v44, %v1448
  %v1646 = vmul.f32 %v45, %v1453
  %v1647 = vmul.f32 %v46, %v1458
  %v1648 = vmul.f32 %v47, %v1463
  %v1649 = vmul.f32 %v48, %v1468
  %v1650 = vmul.f32 %v49, %v1473
  %v1651 = vmul.f32 %v50, %v1478
  %v1652 = vmul.f32 %v51, %v1483
  %v1653 = vmul.f32 %v52, %v1488
  %v1654 = vmul.f32 %v53, %v1493
  %v1655 = vmul.f32 %v54, %v1498
  %v1656 = vmul.f32 %v55, %v1503
  %v1657 = vmul.f32 %v56, %v1508
  %v1658 = vmul.f32 %v57, %v1513
  %v1659 = vmul.f32 %v58, %v1518
  %v1660 = vmul.f32 %v59, %v1523
  %v1661 = vmul.f32 %v60, %v1528
  %v1662 = vmul.f32 %v61, %v1533
  %v1663 = vmul.f32 %v62, %v1538
  %v1664 = vmul.f32 %v63, %v1543
  %v1665 = vmul.f32 %v64, %v1548
  %v1666 = vmul.f32 %v65, %v1553
  %v1667 = vmul.f32 %v66, %v1558
  %v1668 = vmul.f32 %v67, %v1563
  %v1669 = vmul.f32 %v68, %v1568
  %v1670 = vmul.f32 %v69, %v1573
  %v1671 = vmul.f32 %v70, %v1578
  %v1672 = vmul.f32 %v71, %v1583
  %v1673 = vmul.f32 %v72, %v1588
  %v1674 = vmul.f32 %v73, %v1593
  %v1675 = vmul.f32 %v74, %v1598
  %v1676 = vmul.f32 %v75, %v1603
  %v1677 = vmul.f32 %v76, %v1608
  %v1678 = vmul.f32 %v77, %v1613
  %1680 = vset.pattern.permute.xlu0 0
  %1681 = vperm.xlu0 %1680, %v1231
  %v1682 = vpop.permute.xlu0 %1681
  %1685 = vset.pattern.permute.xlu0 0
  %1686 = vperm.xlu0 %1685, %v1232
  %v1687 = vpop.permute.xlu0 %1686
  %1690 = vset.pattern.permute.xlu0 0
  %1691 = vperm.xlu0 %1690, %v1233
  %v1692 = vpop.permute.xlu0 %1691
  %1695 = vset.pattern.permute.xlu0 0
  %1696 = vperm.xlu0 %1695, %v1234
  %v1697 = vpop.permute.xlu0 %1696
  %1700 = vset.pattern.permute.xlu0 0
  %1701 = vperm.xlu0 %1700, %v1235
  %v1702 = vpop.permute.xlu0 %1701
  %1705 = vset.pattern.permute.xlu0 0
  %1706 = vperm.xlu0 %1705, %v1236
  %v1707 = vpop.permute.xlu0 %1706
  %1710 = vset.pattern.permute.xlu0 0
  %1711 = vperm.xlu0 %1710, %v1237
  %v1712 = vpop.permute.xlu0 %1711
  %1715 = vset.pattern.permute.xlu0 0
  %1716 = vperm.xlu0 %1715, %v1238
  %v1717 = vpop.permute.xlu0 %1716
  %1720 = vset.pattern.permute.xlu0 0
  %1721 = vperm.xlu0 %1720, %v1239
  %v1722 = vpop.permute.xlu0 %1721
  %1725 = vset.pattern.permute.xlu0 0
  %1726 = vperm.xlu0 %1725, %v1240
  %v1727 = vpop.permute.xlu0 %1726
  %1730 = vset.pattern.permute.xlu0 0
  %1731 = vperm.xlu0 %1730, %v1241
  %v1732 = vpop.permute.xlu0 %1731
  %1735 = vset.pattern.permute.xlu0 0
  %1736 = vperm.xlu0 %1735, %v1242
  %v1737 = vpop.permute.xlu0 %1736
  %1740 = vset.pattern.permute.xlu0 0
  %1741 = vperm.xlu0 %1740, %v1243
  %v1742 = vpop.permute.xlu0 %1741
  %1745 = vset.pattern.permute.xlu0 0
  %1746 = vperm.xlu0 %1745, %v1244
  %v1747 = vpop.permute.xlu0 %1746
  %1750 = vset.pattern.permute.xlu0 0
  %1751 = vperm.xlu0 %1750, %v1245
  %v1752 = vpop.permute.xlu0 %1751
  %1755 = vset.pattern.permute.xlu0 0
  %1756 = vperm.xlu0 %1755, %v1246
  %v1757 = vpop.permute.xlu0 %1756
  %1760 = vset.pattern.permute.xlu0 0
  %1761 = vperm.xlu0 %1760, %v1247
  %v1762 = vpop.permute.xlu0 %1761
  %1765 = vset.pattern.permute.xlu0 0
  %1766 = vperm.xlu0 %1765, %v1248
  %v1767 = vpop.permute.xlu0 %1766
  %1770 = vset.pattern.permute.xlu0 0
  %1771 = vperm.xlu0 %1770, %v1249
  %v1772 = vpop.permute.xlu0 %1771
  %1775 = vset.pattern.permute.xlu0 0
  %1776 = vperm.xlu0 %1775, %v1250
  %v1777 = vpop.permute.xlu0 %1776
  %1780 = vset.pattern.permute.xlu0 0
  %1781 = vperm.xlu0 %1780, %v1251
  %v1782 = vpop.permute.xlu0 %1781
  %1785 = vset.pattern.permute.xlu0 0
  %1786 = vperm.xlu0 %1785, %v1252
  %v1787 = vpop.permute.xlu0 %1786
  %1790 = vset.pattern.permute.xlu0 0
  %1791 = vperm.xlu0 %1790, %v1253
  %v1792 = vpop.permute.xlu0 %1791
  %1795 = vset.pattern.permute.xlu0 0
  %1796 = vperm.xlu0 %1795, %v1254
  %v1797 = vpop.permute.xlu0 %1796
  %1800 = vset.pattern.permute.xlu0 0
  %1801 = vperm.xlu0 %1800, %v1255
  %v1802 = vpop.permute.xlu0 %1801
  %1805 = vset.pattern.permute.xlu0 0
  %1806 = vperm.xlu0 %1805, %v1256
  %v1807 = vpop.permute.xlu0 %1806
  %1810 = vset.pattern.permute.xlu0 0
  %1811 = vperm.xlu0 %1810, %v1257
  %v1812 = vpop.permute.xlu0 %1811
  %1815 = vset.pattern.permute.xlu0 0
  %1816 = vperm.xlu0 %1815, %v1258
  %v1817 = vpop.permute.xlu0 %1816
  %1820 = vset.pattern.permute.xlu0 0
  %1821 = vperm.xlu0 %1820, %v1259
  %v1822 = vpop.permute.xlu0 %1821
  %1825 = vset.pattern.permute.xlu0 0
  %1826 = vperm.xlu0 %1825, %v1260
  %v1827 = vpop.permute.xlu0 %1826
  %1830 = vset.pattern.permute.xlu0 0
  %1831 = vperm.xlu0 %1830, %v1261
  %v1832 = vpop.permute.xlu0 %1831
  %1835 = vset.pattern.permute.xlu0 0
  %1836 = vperm.xlu0 %1835, %v1262
  %v1837 = vpop.permute.xlu0 %1836
  %1840 = vset.pattern.permute.xlu0 0
  %1841 = vperm.xlu0 %1840, %v1263
  %v1842 = vpop.permute.xlu0 %1841
  %1845 = vset.pattern.permute.xlu0 0
  %1846 = vperm.xlu0 %1845, %v1264
  %v1847 = vpop.permute.xlu0 %1846
  %1850 = vset.pattern.permute.xlu0 0
  %1851 = vperm.xlu0 %1850, %v1265
  %v1852 = vpop.permute.xlu0 %1851
  %1855 = vset.pattern.permute.xlu0 0
  %1856 = vperm.xlu0 %1855, %v1266
  %v1857 = vpop.permute.xlu0 %1856
  %1860 = vset.pattern.permute.xlu0 0
  %1861 = vperm.xlu0 %1860, %v1267
  %v1862 = vpop.permute.xlu0 %1861
  %1865 = vset.pattern.permute.xlu0 0
  %1866 = vperm.xlu0 %1865, %v1268
  %v1867 = vpop.permute.xlu0 %1866
  %1870 = vset.pattern.permute.xlu0 0
  %1871 = vperm.xlu0 %1870, %v1269
  %v1872 = vpop.permute.xlu0 %1871
  %1875 = vset.pattern.permute.xlu0 0
  %1876 = vperm.xlu0 %1875, %v1270
  %v1877 = vpop.permute.xlu0 %1876
  %1880 = vset.pattern.permute.xlu0 0
  %1881 = vperm.xlu0 %1880, %v1271
  %v1882 = vpop.permute.xlu0 %1881
  %1885 = vset.pattern.permute.xlu0 0
  %1886 = vperm.xlu0 %1885, %v1272
  %v1887 = vpop.permute.xlu0 %1886
  %1890 = vset.pattern.permute.xlu0 0
  %1891 = vperm.xlu0 %1890, %v1273
  %v1892 = vpop.permute.xlu0 %1891
  %1895 = vset.pattern.permute.xlu0 0
  %1896 = vperm.xlu0 %1895, %v1274
  %v1897 = vpop.permute.xlu0 %1896
  %1900 = vset.pattern.permute.xlu0 0
  %1901 = vperm.xlu0 %1900, %v1275
  %v1902 = vpop.permute.xlu0 %1901
  %1905 = vset.pattern.permute.xlu0 0
  %1906 = vperm.xlu0 %1905, %v1276
  %v1907 = vpop.permute.xlu0 %1906
  %1910 = vset.pattern.permute.xlu0 0
  %1911 = vperm.xlu0 %1910, %v1277
  %v1912 = vpop.permute.xlu0 %1911
  %1915 = vset.pattern.permute.xlu0 0
  %1916 = vperm.xlu0 %1915, %v1278
  %v1917 = vpop.permute.xlu0 %1916
  %1920 = vset.pattern.permute.xlu0 0
  %1921 = vperm.xlu0 %1920, %v1279
  %v1922 = vpop.permute.xlu0 %1921
  %1925 = vset.pattern.permute.xlu0 0
  %1926 = vperm.xlu0 %1925, %v1280
  %v1927 = vpop.permute.xlu0 %1926
  %1930 = vset.pattern.permute.xlu0 0
  %1931 = vperm.xlu0 %1930, %v1281
  %v1932 = vpop.permute.xlu0 %1931
  %1935 = vset.pattern.permute.xlu0 0
  %1936 = vperm.xlu0 %1935, %v1282
  %v1937 = vpop.permute.xlu0 %1936
  %1940 = vset.pattern.permute.xlu0 0
  %1941 = vperm.xlu0 %1940, %v1283
  %v1942 = vpop.permute.xlu0 %1941
  %1945 = vset.pattern.permute.xlu0 0
  %1946 = vperm.xlu0 %1945, %v1284
  %v1947 = vpop.permute.xlu0 %1946
  %1950 = vset.pattern.permute.xlu0 0
  %1951 = vperm.xlu0 %1950, %v1285
  %v1952 = vpop.permute.xlu0 %1951
  %1955 = vset.pattern.permute.xlu0 0
  %1956 = vperm.xlu0 %1955, %v1286
  %v1957 = vpop.permute.xlu0 %1956
  %1960 = vset.pattern.permute.xlu0 0
  %1961 = vperm.xlu0 %1960, %v1287
  %v1962 = vpop.permute.xlu0 %1961
  %1965 = vset.pattern.permute.xlu0 0
  %1966 = vperm.xlu0 %1965, %v1288
  %v1967 = vpop.permute.xlu0 %1966
  %1970 = vset.pattern.permute.xlu0 0
  %1971 = vperm.xlu0 %1970, %v1289
  %v1972 = vpop.permute.xlu0 %1971
  %1975 = vset.pattern.permute.xlu0 0
  %1976 = vperm.xlu0 %1975, %v1290
  %v1977 = vpop.permute.xlu0 %1976
  %1980 = vset.pattern.permute.xlu0 0
  %1981 = vperm.xlu0 %1980, %v1291
  %v1982 = vpop.permute.xlu0 %1981
  %1985 = vset.pattern.permute.xlu0 0
  %1986 = vperm.xlu0 %1985, %v1292
  %v1987 = vpop.permute.xlu0 %1986
  %1990 = vset.pattern.permute.xlu0 0
  %1991 = vperm.xlu0 %1990, %v1293
  %v1992 = vpop.permute.xlu0 %1991
  %1995 = vset.pattern.permute.xlu0 0
  %1996 = vperm.xlu0 %1995, %v1294
  %v1997 = vpop.permute.xlu0 %1996
  %v1999 = vadd.f32 %v1615, %v1682
  %v2000 = vadd.f32 %v1616, %v1687
  %v2001 = vadd.f32 %v1617, %v1692
  %v2002 = vadd.f32 %v1618, %v1697
  %v2003 = vadd.f32 %v1619, %v1702
  %v2004 = vadd.f32 %v1620, %v1707
  %v2005 = vadd.f32 %v1621, %v1712
  %v2006 = vadd.f32 %v1622, %v1717
  %v2007 = vadd.f32 %v1623, %v1722
  %v2008 = vadd.f32 %v1624, %v1727
  %v2009 = vadd.f32 %v1625, %v1732
  %v2010 = vadd.f32 %v1626, %v1737
  %v2011 = vadd.f32 %v1627, %v1742
  %v2012 = vadd.f32 %v1628, %v1747
  %v2013 = vadd.f32 %v1629, %v1752
  %v2014 = vadd.f32 %v1630, %v1757
  %v2015 = vadd.f32 %v1631, %v1762
  %v2016 = vadd.f32 %v1632, %v1767
  %v2017 = vadd.f32 %v1633, %v1772
  %v2018 = vadd.f32 %v1634, %v1777
  %v2019 = vadd.f32 %v1635, %v1782
  %v2020 = vadd.f32 %v1636, %v1787
  %v2021 = vadd.f32 %v1637, %v1792
  %v2022 = vadd.f32 %v1638, %v1797
  %v2023 = vadd.f32 %v1639, %v1802
  %v2024 = vadd.f32 %v1640, %v1807
  %v2025 = vadd.f32 %v1641, %v1812
  %v2026 = vadd.f32 %v1642, %v1817
  %v2027 = vadd.f32 %v1643, %v1822
  %v2028 = vadd.f32 %v1644, %v1827
  %v2029 = vadd.f32 %v1645, %v1832
  %v2030 = vadd.f32 %v1646, %v1837
  %v2031 = vadd.f32 %v1647, %v1842
  %v2032 = vadd.f32 %v1648, %v1847
  %v2033 = vadd.f32 %v1649, %v1852
  %v2034 = vadd.f32 %v1650, %v1857
  %v2035 = vadd.f32 %v1651, %v1862
  %v2036 = vadd.f32 %v1652, %v1867
  %v2037 = vadd.f32 %v1653, %v1872
  %v2038 = vadd.f32 %v1654, %v1877
  %v2039 = vadd.f32 %v1655, %v1882
  %v2040 = vadd.f32 %v1656, %v1887
  %v2041 = vadd.f32 %v1657, %v1892
  %v2042 = vadd.f32 %v1658, %v1897
  %v2043 = vadd.f32 %v1659, %v1902
  %v2044 = vadd.f32 %v1660, %v1907
  %v2045 = vadd.f32 %v1661, %v1912
  %v2046 = vadd.f32 %v1662, %v1917
  %v2047 = vadd.f32 %v1663, %v1922
  %v2048 = vadd.f32 %v1664, %v1927
  %v2049 = vadd.f32 %v1665, %v1932
  %v2050 = vadd.f32 %v1666, %v1937
  %v2051 = vadd.f32 %v1667, %v1942
  %v2052 = vadd.f32 %v1668, %v1947
  %v2053 = vadd.f32 %v1669, %v1952
  %v2054 = vadd.f32 %v1670, %v1957
  %v2055 = vadd.f32 %v1671, %v1962
  %v2056 = vadd.f32 %v1672, %v1967
  %v2057 = vadd.f32 %v1673, %v1972
  %v2058 = vadd.f32 %v1674, %v1977
  %v2059 = vadd.f32 %v1675, %v1982
  %v2060 = vadd.f32 %v1676, %v1987
  %v2061 = vadd.f32 %v1677, %v1992
  %v2062 = vadd.f32 %v1678, %v1997
  %v2063 = vmax.f32 %v1999, 0.0
  %v2064 = vmax.f32 %v2000, 0.0
  %v2065 = vmax.f32 %v2001, 0.0
  %v2066 = vmax.f32 %v2002, 0.0
  %v2067 = vmax.f32 %v2003, 0.0
  %v2068 = vmax.f32 %v2004, 0.0
  %v2069 = vmax.f32 %v2005, 0.0
  %v2070 = vmax.f32 %v2006, 0.0
  %v2071 = vmax.f32 %v2007, 0.0
  %v2072 = vmax.f32 %v2008, 0.0
  %v2073 = vmax.f32 %v2009, 0.0
  %v2074 = vmax.f32 %v2010, 0.0
  %v2075 = vmax.f32 %v2011, 0.0
  %v2076 = vmax.f32 %v2012, 0.0
  %v2077 = vmax.f32 %v2013, 0.0
  %v2078 = vmax.f32 %v2014, 0.0
  %v2079 = vmax.f32 %v2015, 0.0
  %v2080 = vmax.f32 %v2016, 0.0
  %v2081 = vmax.f32 %v2017, 0.0
  %v2082 = vmax.f32 %v2018, 0.0
  %v2083 = vmax.f32 %v2019, 0.0
  %v2084 = vmax.f32 %v2020, 0.0
  %v2085 = vmax.f32 %v2021, 0.0
  %v2086 = vmax.f32 %v2022, 0.0
  %v2087 = vmax.f32 %v2023, 0.0
  %v2088 = vmax.f32 %v2024, 0.0
  %v2089 = vmax.f32 %v2025, 0.0
  %v2090 = vmax.f32 %v2026, 0.0
  %v2091 = vmax.f32 %v2027, 0.0
  %v2092 = vmax.f32 %v2028, 0.0
  %v2093 = vmax.f32 %v2029, 0.0
  %v2094 = vmax.f32 %v2030, 0.0
  %v2095 = vmax.f32 %v2031, 0.0
  %v2096 = vmax.f32 %v2032, 0.0
  %v2097 = vmax.f32 %v2033, 0.0
  %v2098 = vmax.f32 %v2034, 0.0
  %v2099 = vmax.f32 %v2035, 0.0
  %v2100 = vmax.f32 %v2036, 0.0
  %v2101 = vmax.f32 %v2037, 0.0
  %v2102 = vmax.f32 %v2038, 0.0
  %v2103 = vmax.f32 %v2039, 0.0
  %v2104 = vmax.f32 %v2040, 0.0
  %v2105 = vmax.f32 %v2041, 0.0
  %v2106 = vmax.f32 %v2042, 0.0
  %v2107 = vmax.f32 %v2043, 0.0
  %v2108 = vmax.f32 %v2044, 0.0
  %v2109 = vmax.f32 %v2045, 0.0
  %v2110 = vmax.f32 %v2046, 0.0
  %v2111 = vmax.f32 %v2047, 0.0
  %v2112 = vmax.f32 %v2048, 0.0
  %v2113 = vmax.f32 %v2049, 0.0
  %v2114 = vmax.f32 %v2050, 0.0
  %v2115 = vmax.f32 %v2051, 0.0
  %v2116 = vmax.f32 %v2052, 0.0
  %v2117 = vmax.f32 %v2053, 0.0
  %v2118 = vmax.f32 %v2054, 0.0
  %v2119 = vmax.f32 %v2055, 0.0
  %v2120 = vmax.f32 %v2056, 0.0
  %v2121 = vmax.f32 %v2057, 0.0
  %v2122 = vmax.f32 %v2058, 0.0
  %v2123 = vmax.f32 %v2059, 0.0
  %v2124 = vmax.f32 %v2060, 0.0
  %v2125 = vmax.f32 %v2061, 0.0
  %v2126 = vmax.f32 %v2062, 0.0
  %2127 = vst.msk [vmem:[%s3] sm:$0xff] %vm78, %v2063
  %2128 = vst.msk [vmem:[%s3 + $0x8] sm:$0xff] %vm78, %v2064
  %2129 = vst.msk [vmem:[%s3 + $0x10] sm:$0xff] %vm78, %v2065
  %2130 = vst.msk [vmem:[%s3 + $0x18] sm:$0xff] %vm78, %v2066
  %2131 = vst.msk [vmem:[%s3 + $0x20] sm:$0xff] %vm78, %v2067
  %2132 = vst.msk [vmem:[%s3 + $0x28] sm:$0xff] %vm78, %v2068
  %2133 = vst.msk [vmem:[%s3 + $0x30] sm:$0xff] %vm78, %v2069
  %2134 = vst.msk [vmem:[%s3 + $0x38] sm:$0xff] %vm78, %v2070
  %2135 = vst.msk [vmem:[%s3 + $0x40] sm:$0xff] %vm78, %v2071
  %2136 = vst.msk [vmem:[%s3 + $0x48] sm:$0xff] %vm78, %v2072
  %2137 = vst.msk [vmem:[%s3 + $0x50] sm:$0xff] %vm78, %v2073
  %2138 = vst.msk [vmem:[%s3 + $0x58] sm:$0xff] %vm78, %v2074
  %2139 = vst.msk [vmem:[%s3 + $0x60] sm:$0xff] %vm78, %v2075
  %2140 = vst.msk [vmem:[%s3 + $0x68] sm:$0xff] %vm78, %v2076
  %2141 = vst.msk [vmem:[%s3 + $0x70] sm:$0xff] %vm78, %v2077
  %2142 = vst.msk [vmem:[%s3 + $0x78] sm:$0xff] %vm78, %v2078
  %2143 = vst.msk [vmem:[%s3 + $0x80] sm:$0xff] %vm78, %v2079
  %2144 = vst.msk [vmem:[%s3 + $0x88] sm:$0xff] %vm78, %v2080
  %2145 = vst.msk [vmem:[%s3 + $0x90] sm:$0xff] %vm78, %v2081
  %2146 = vst.msk [vmem:[%s3 + $0x98] sm:$0xff] %vm78, %v2082
  %2147 = vst.msk [vmem:[%s3 + $0xa0] sm:$0xff] %vm78, %v2083
  %2148 = vst.msk [vmem:[%s3 + $0xa8] sm:$0xff] %vm78, %v2084
  %2149 = vst.msk [vmem:[%s3 + $0xb0] sm:$0xff] %vm78, %v2085
  %2150 = vst.msk [vmem:[%s3 + $0xb8] sm:$0xff] %vm78, %v2086
  %2151 = vst.msk [vmem:[%s3 + $0xc0] sm:$0xff] %vm78, %v2087
  %2152 = vst.msk [vmem:[%s3 + $0xc8] sm:$0xff] %vm78, %v2088
  %2153 = vst.msk [vmem:[%s3 + $0xd0] sm:$0xff] %vm78, %v2089
  %2154 = vst.msk [vmem:[%s3 + $0xd8] sm:$0xff] %vm78, %v2090
  %2155 = vst.msk [vmem:[%s3 + $0xe0] sm:$0xff] %vm78, %v2091
  %2156 = vst.msk [vmem:[%s3 + $0xe8] sm:$0xff] %vm78, %v2092
  %2157 = vst.msk [vmem:[%s3 + $0xf0] sm:$0xff] %vm78, %v2093
  %2158 = vst.msk [vmem:[%s3 + $0xf8] sm:$0xff] %vm78, %v2094
  %2159 = vst.msk [vmem:[%s3 + $0x100] sm:$0xff] %vm78, %v2095
  %2160 = vst.msk [vmem:[%s3 + $0x108] sm:$0xff] %vm78, %v2096
  %2161 = vst.msk [vmem:[%s3 + $0x110] sm:$0xff] %vm78, %v2097
  %2162 = vst.msk [vmem:[%s3 + $0x118] sm:$0xff] %vm78, %v2098
  %2163 = vst.msk [vmem:[%s3 + $0x120] sm:$0xff] %vm78, %v2099
  %2164 = vst.msk [vmem:[%s3 + $0x128] sm:$0xff] %vm78, %v2100
  %2165 = vst.msk [vmem:[%s3 + $0x130] sm:$0xff] %vm78, %v2101
  %2166 = vst.msk [vmem:[%s3 + $0x138] sm:$0xff] %vm78, %v2102
  %2167 = vst.msk [vmem:[%s3 + $0x140] sm:$0xff] %vm78, %v2103
  %2168 = vst.msk [vmem:[%s3 + $0x148] sm:$0xff] %vm78, %v2104
  %2169 = vst.msk [vmem:[%s3 + $0x150] sm:$0xff] %vm78, %v2105
  %2170 = vst.msk [vmem:[%s3 + $0x158] sm:$0xff] %vm78, %v2106
  %2171 = vst.msk [vmem:[%s3 + $0x160] sm:$0xff] %vm78, %v2107
  %2172 = vst.msk [vmem:[%s3 + $0x168] sm:$0xff] %vm78, %v2108
  %2173 = vst.msk [vmem:[%s3 + $0x170] sm:$0xff] %vm78, %v2109
  %2174 = vst.msk [vmem:[%s3 + $0x178] sm:$0xff] %vm78, %v2110
  %2175 = vst.msk [vmem:[%s3 + $0x180] sm:$0xff] %vm78, %v2111
  %2176 = vst.msk [vmem:[%s3 + $0x188] sm:$0xff] %vm78, %v2112
  %2177 = vst.msk [vmem:[%s3 + $0x190] sm:$0xff] %vm78, %v2113
  %2178 = vst.msk [vmem:[%s3 + $0x198] sm:$0xff] %vm78, %v2114
  %2179 = vst.msk [vmem:[%s3 + $0x1a0] sm:$0xff] %vm78, %v2115
  %2180 = vst.msk [vmem:[%s3 + $0x1a8] sm:$0xff] %vm78, %v2116
  %2181 = vst.msk [vmem:[%s3 + $0x1b0] sm:$0xff] %vm78, %v2117
  %2182 = vst.msk [vmem:[%s3 + $0x1b8] sm:$0xff] %vm78, %v2118
  %2183 = vst.msk [vmem:[%s3 + $0x1c0] sm:$0xff] %vm78, %v2119
  %2184 = vst.msk [vmem:[%s3 + $0x1c8] sm:$0xff] %vm78, %v2120
  %2185 = vst.msk [vmem:[%s3 + $0x1d0] sm:$0xff] %vm78, %v2121
  %2186 = vst.msk [vmem:[%s3 + $0x1d8] sm:$0xff] %vm78, %v2122
  %2187 = vst.msk [vmem:[%s3 + $0x1e0] sm:$0xff] %vm78, %v2123
  %2188 = vst.msk [vmem:[%s3 + $0x1e8] sm:$0xff] %vm78, %v2124
  %2189 = vst.msk [vmem:[%s3 + $0x1f0] sm:$0xff] %vm78, %v2125
  %2190 = vst.msk [vmem:[%s3 + $0x1f8] sm:$0xff] %vm78, %v2126
  // Predicated region
  $region14: #{tpu_custom_call.1} parent=0 // pred_check
    _
  $region15: #{tpu_custom_call.1} parent=0 // pred_check_branch
    %2192 = sbr.rel (0) target = $region17
  $region16: #{tpu_custom_call.1} parent=0 // pred_region
    _
  $region17: #{tpu_custom_call.1} parent=0 // pred_fallthru
    _
  // Predicated region
  $region18: #{tpu_custom_call.1} parent=0 // pred_check
    _
  $region19: #{tpu_custom_call.1} parent=0 // pred_check_branch
    %2194 = sbr.rel (0) target = $region21
  $region20: #{tpu_custom_call.1} parent=0 // pred_region
    _
  $region21: #{tpu_custom_call.1} parent=0 // pred_fallthru
    _

</llo_original>
